<compile_context>
chip_gen: v6e
topology: v6e:2x2x1
jax: 0.10.0
libtpu: 0.0.40
codegen_flags: <defaults>
</compile_context>

<pallas_src>
import jax
import jax.numpy as jnp
from jax import lax
from jax.experimental import pallas as pl
from jax.experimental.pallas import tpu as pltpu


def _vmem_budget_bytes():
    """~75% of physical VMEM (96 MiB v5e/v6e, 48 MiB v7x); safe fallback."""
    try:
        cap = int(pltpu.get_tpu_info().vmem_capacity_bytes)
        if not (32 * 1024 * 1024 <= cap <= 256 * 1024 * 1024):
            cap = 64 * 1024 * 1024
    except Exception:
        cap = 64 * 1024 * 1024            # assume the smallest (v7x, 64 MiB)
    return min((3 * cap) // 4, 96 * 1024 * 1024)


# ----------------------------------------------------------------------------
# Conv path (with_conv=True): pad (0,1,0,1) + Conv2d(C, C, 3, stride=2)
# ----------------------------------------------------------------------------
def _conv3x3s2_kernel(ee_ref, eex_ref, eo_ref, eox_ref, oe_ref, oo_ref,
                      w_ref, b_ref, o_ref):
    # Block shapes:
    #   ee : (1, TH, Wo+1, C)  even-row/even-col plane, body rows
    #   eex: (1, 1,  Wo+1, C)  one extra even row (kh=2 taps of last out row)
    #   eo : (1, TH, Wo,   C)  even-row/odd-col plane, body rows
    #   eox: (1, 1,  Wo,   C)  extra even row
    #   oe : (1, TH, Wo+1, C)  odd-row/even-col plane
    #   oo : (1, TH, Wo,   C)  odd-row/odd-col plane
    #   w  : (9, C, C)  k = kh*3 + kw, laid out (ci, co)
    #   b  : (1, C)
    #   o  : (1, TH, Wo, C)
    TH, Wo, C = o_ref.shape[1], o_ref.shape[2], o_ref.shape[3]

    def tapdot(tap, k):
        # (rows, Wo, C) x (C, C) -> (rows*Wo, C).  The reshape only collapses
        # leading (sublane) dims; the lane dim C is untouched (no-op when
        # Wo % 8 == 0, which holds for typical LDM spatial sizes).
        rows = tap.shape[0]
        return jnp.dot(tap.reshape(rows * Wo, C), w_ref[k],
                       preferred_element_type=jnp.float32)

    ee = ee_ref[0]    # (TH, Wo+1, C)
    eo = eo_ref[0]    # (TH, Wo,   C)
    oe = oe_ref[0]    # (TH, Wo+1, C)
    oo = oo_ref[0]    # (TH, Wo,   C)

    # Bias-initialized accumulator; one tap live at a time (no eager tuple of
    # 9 reshaped taps, no halo concatenate -> peak VMEM ~ 1 input tile + acc).
    # TODO(synk): for C <= 256 on v6e/v7x, packing the 9 taps along K into one
    # (TH*Wo, 9C) @ (9C, C) matmul would double MXU occupancy; skipped because
    # the op is HBM-bound at LDM channel counts and the pack buffer costs an
    # extra input tile of VMEM.
    acc = jnp.broadcast_to(b_ref[...].astype(jnp.float32), (TH * Wo, C))
    acc = acc + tapdot(ee[:, :Wo, :], 0)       # (kh=0, kw=0)
    acc = acc + tapdot(eo, 1)                  # (0, 1)
    acc = acc + tapdot(ee[:, 1:, :], 2)        # (0, 2)
    acc = acc + tapdot(oe[:, :Wo, :], 3)       # (1, 0)
    acc = acc + tapdot(oo, 4)                  # (1, 1)
    acc = acc + tapdot(oe[:, 1:, :], 5)        # (1, 2)

    # kh=2 taps read even-plane rows 1..TH: rows 1..TH-1 come from the body
    # block, row TH from the 1-row extra block -- two offset matmuls instead
    # of an in-kernel concatenate (no (TH+1)-row VMEM copy).
    eex = eex_ref[0]  # (1, Wo+1, C)
    eox = eox_ref[0]  # (1, Wo,   C)
    last = (tapdot(eex[:, :Wo, :], 6) + tapdot(eox, 7)
            + tapdot(eex[:, 1:, :], 8))

    if TH > 1:
        hi = (tapdot(ee[1:, :Wo, :], 6) + tapdot(eo[1:], 7)
              + tapdot(ee[1:, 1:, :], 8))
        top = acc[:(TH - 1) * Wo] + hi
        o_ref[0, :TH - 1, :, :] = top.reshape(TH - 1, Wo, C).astype(o_ref.dtype)
    bot = acc[(TH - 1) * Wo:] + last
    o_ref[0, TH - 1, :, :] = bot.astype(o_ref.dtype)


def _pick_row_block(N, Ho, Wo, C, itemsize, vmem_budget):
    """Largest output-row block whose pipelined working set fits the budget:
    double-buffered inputs + double-buffered output + f32 temporaries."""
    in_row = (4 * Wo + 2) * C * itemsize            # ee+eo+oe+oo per out row
    out_row = Wo * C * itemsize
    tmp_row = 4 * Wo * C * 4                        # f32 acc + live tap + slack
    per_row = 2 * in_row + 2 * out_row + tmp_row
    fixed = 2 * 9 * C * C * itemsize + 4 * (2 * Wo + 1) * C * itemsize
    cap = max(1, (vmem_budget - fixed) // per_row)
    TH = int(min(Ho, cap))
    if N == 1:                                      # keep >= 2 grid steps so
        TH = min(TH, pl.cdiv(Ho, 2))                # megacore has work to split
    TH = max(1, int(TH))
    # Re-balance: same number of row blocks, near-equal sizes (cdiv grid).
    return int(pl.cdiv(Ho, pl.cdiv(Ho, TH)))


def downsample_conv_nhwc(x, weight, bias):
    """3x3 stride-2 conv with (0,1,0,1) zero pad.  NHWC in / NHWC out.

    x: (N, H, W, C); weight: (C, C, 3, 3) OIHW; bias: (C,).
    """
    N, H, W, C = x.shape
    Ho, Wo = H // 2, W // 2
    itemsize = jnp.dtype(x.dtype).itemsize

    # Asymmetric pad (bottom/right by 1) + space-to-depth parity planes.
    # XLA fuses pad + the four strided slices into copy fusions (~1x input
    # bytes); no im2col matrix is ever materialized.
    x_p = jnp.pad(x, ((0, 0), (0, 1), (0, 1), (0, 0)))
    x_ee = x_p[:, 0::2, 0::2, :][:, :Ho + 1, :Wo + 1, :]
    x_eo = x_p[:, 0::2, 1::2, :][:, :Ho + 1, :Wo, :]
    x_oe = x_p[:, 1::2, 0::2, :][:, :Ho, :Wo + 1, :]
    x_oo = x_p[:, 1::2, 1::2, :][:, :Ho, :Wo, :]

    # OIHW -> (kh*3 + kw, ci, co); kept in the activation dtype (bf16 models
    # keep bf16 planes/weights/output; accumulation stays f32).
    w9 = weight.transpose(2, 3, 1, 0).reshape(9, C, C).astype(x.dtype)
    b2 = bias.reshape(1, C)

    vmem_budget = _vmem_budget_bytes()
    TH = _pick_row_block(N, Ho, Wo, C, itemsize, vmem_budget)
    grid = (N, pl.cdiv(Ho, TH))

    body = lambda n, r: (n, r, 0, 0)
    # Single row right below the body block; clamped so a ragged last block
    # never requests an out-of-range DMA (its data only feeds masked rows).
    extra = lambda n, r: (n, jnp.minimum(r * TH + TH, Ho), 0, 0)

    flops = 2 * N * Ho * Wo * 9 * C * C
    bytes_accessed = itemsize * (N * (H + 1) * (W + 1) * C + 9 * C * C
                                 + N * Ho * Wo * C)

    return pl.pallas_call(
        _conv3x3s2_kernel,
        out_shape=jax.ShapeDtypeStruct((N, Ho, Wo, C), x.dtype),
        grid=grid,
        in_specs=[
            pl.BlockSpec((1, TH, Wo + 1, C), body),            # x_ee body
            pl.BlockSpec((1, 1, Wo + 1, C), extra),            # x_ee extra row
            pl.BlockSpec((1, TH, Wo, C), body),                # x_eo body
            pl.BlockSpec((1, 1, Wo, C), extra),                # x_eo extra row
            pl.BlockSpec((1, TH, Wo + 1, C), body),            # x_oe
            pl.BlockSpec((1, TH, Wo, C), body),                # x_oo
            pl.BlockSpec((9, C, C), lambda n, r: (0, 0, 0)),   # weights
            pl.BlockSpec((1, C), lambda n, r: (0, 0)),         # bias
        ],
        out_specs=pl.BlockSpec((1, TH, Wo, C), body),
        compiler_params=pltpu.CompilerParams(
            dimension_semantics=("parallel", "parallel"),
            vmem_limit_bytes=int(vmem_budget)),
        cost_estimate=pl.CostEstimate(flops=flops, transcendentals=0,
                                      bytes_accessed=int(bytes_accessed)),
    )(x_ee, x_ee, x_eo, x_eo, x_oe, x_oo, w9, b2)


@jax.jit
def downsample_conv(x, weight, bias):
    """PyTorch-parity entry point: NCHW in, NCHW out."""
    out_nhwc = downsample_conv_nhwc(jnp.transpose(x, (0, 2, 3, 1)), weight, bias)
    # TODO(synk): callers that must stay NCHW end-to-end could fold this
    # transpose into the kernel store ((1, C, TH, Wo) out block, XLU slack).
    return jnp.transpose(out_nhwc, (0, 3, 1, 2))


# ----------------------------------------------------------------------------
# Avg-pool path (with_conv=False)
# ----------------------------------------------------------------------------
def _avgpool2x2_kernel(x_ref, s_ref, o_ref):
    # x: (TR, 2*W) rows are [row0 | row1] of one 2 x W pooling slab.
    # s: (W, Wo) selection matrix with entries in {0, 0.25} (exact in bf16).
    W = s_ref.shape[0]
    a = x_ref[...]
    rowsum = a[:, :W].astype(jnp.float32) + a[:, W:].astype(jnp.float32)
    s = s_ref[...]
    # 2:1 reduction along W without Precision.HIGHEST: split rowsum into a
    # bf16-exact part + small residual and run two DEFAULT MXU passes.  The
    # selection weights are bf16-exact, so the result matches the f32 average
    # to ~2^-17 relative at 1/3 the MXU work of HIGHEST (still DMA-hidden).
    hi = rowsum.astype(jnp.bfloat16).astype(jnp.float32)
    lo = rowsum - hi
    out = jnp.dot(hi, s, preferred_element_type=jnp.float32)
    out = out + jnp.dot(lo, s, preferred_element_type=jnp.float32)
    o_ref[...] = out.astype(o_ref.dtype)


@jax.jit
def downsample_avgpool(x):
    """avg_pool2d(kernel=2, stride=2) on NCHW input (floor on odd dims)."""
    N, C, H, W = x.shape
    Ho, Wo = H // 2, W // 2
    if H % 2:
        x = x[:, :, :2 * Ho, :]
    # Free (layout-preserving) reshape: one kernel row per 2 x W pooling slab.
    x2d = x.reshape(N * C * Ho, 2 * W)
    R = N * C * Ho

    w_idx = jnp.arange(W)
    sel = (w_idx[:, None] // 2 == jnp.arange(Wo)[None, :]) & (w_idx[:, None] < 2 * Wo)
    s_mat = 0.25 * sel.astype(jnp.float32)

    # Big row blocks: the op is pure HBM bandwidth; amortize per-step overhead
    # while keeping the double-buffered working set inside v7x's 64 MiB VMEM.
    itemsize = jnp.dtype(x.dtype).itemsize
    row_bytes = 2 * W * itemsize
    cap = max(8, (8 * 1024 * 1024) // row_bytes)
    TR = int(min(R, 8192, cap))
    if TR < R:
        TR = max(8, (TR // 8) * 8)
    grid = (pl.cdiv(R, TR),)
    # TODO(synk): if Wo < 128 the (TR, Wo) store is lane-sparse (masked vst);
    # packing two pooling slabs per kernel row would make it lane-dense.

    out2d = pl.pallas_call(
        _avgpool2x2_kernel,
        out_shape=jax.ShapeDtypeStruct((R, Wo), x.dtype),
        grid=grid,
        in_specs=[
            pl.BlockSpec((TR, 2 * W), lambda i: (i, 0)),
            pl.BlockSpec((W, Wo), lambda i: (0, 0)),
        ],
        out_specs=pl.BlockSpec((TR, Wo), lambda i: (i, 0)),
        compiler_params=pltpu.CompilerParams(
            dimension_semantics=("parallel",),
            vmem_limit_bytes=48 * 1024 * 1024),
        cost_estimate=pl.CostEstimate(
            flops=4 * R * W * Wo + 3 * R * W, transcendentals=0,
            bytes_accessed=int(itemsize * (R * 2 * W + R * Wo) + 4 * W * Wo)),
    )(x2d, s_mat)

    return out2d.reshape(N, C, Ho, Wo)


def downsample(x, *, with_conv, weight=None, bias=None):
    if with_conv:
        return downsample_conv(x, weight, bias)
    return downsample_avgpool(x)


# ----------------------------------------------------------------------------
# References (pure JAX) for correctness checking
# ----------------------------------------------------------------------------
def _ref_conv(x, weight, bias):
    x_pad = jnp.pad(x, ((0, 0), (0, 0), (0, 1), (0, 1)))
    out = lax.conv_general_dilated(
        x_pad, weight, window_strides=(2, 2), padding="VALID",
        dimension_numbers=("NCHW", "OIHW", "NCHW"),
        precision=lax.Precision.HIGHEST)
    return out + bias.reshape(1, -1, 1, 1)


def _ref_avgpool(x):
    N, C, H, W = x.shape
    Ho, Wo = H // 2, W // 2
    xt = x[:, :, :2 * Ho, :2 * Wo]
    return xt.reshape(N, C, Ho, 2, Wo, 2).mean(axis=(3, 5))


# ----------------------------------------------------------------------------
if __name__ == "__main__":
    key = jax.random.PRNGKey(0)
    kx, kw, kb, kx2, kw2, kb2, kx3 = jax.random.split(key, 7)

    # --- with_conv=True, even spatial dims --------------------------------
    N, C, H, W = 2, 4, 16, 16
    x = jax.random.normal(kx, (N, C, H, W), dtype=jnp.float32)
    weight = 0.1 * jax.random.normal(kw, (C, C, 3, 3), dtype=jnp.float32)
    bias = 0.1 * jax.random.normal(kb, (C,), dtype=jnp.float32)

    y = jax.block_until_ready(downsample(x, with_conv=True, weight=weight, bias=bias))
    y_ref = _ref_conv(x, weight, bias)
    assert y.shape == (N, C, H // 2, W // 2), y.shape
    assert jnp.allclose(y, y_ref, atol=2e-2, rtol=2e-2), \
        float(jnp.max(jnp.abs(y - y_ref)))

    # --- with_conv=True, Ho=9 -> ragged (cdiv) row grid + halo split -------
    N2, C2, H2, W2 = 1, 8, 18, 16
    x2 = jax.random.normal(kx2, (N2, C2, H2, W2), dtype=jnp.float32)
    weight2 = 0.1 * jax.random.normal(kw2, (C2, C2, 3, 3), dtype=jnp.float32)
    bias2 = 0.1 * jax.random.normal(kb2, (C2,), dtype=jnp.float32)
    y2 = jax.block_until_ready(
        downsample(x2, with_conv=True, weight=weight2, bias=bias2))
    y2_ref = _ref_conv(x2, weight2, bias2)
    assert y2.shape == (N2, C2, H2 // 2, W2 // 2), y2.shape
    assert jnp.allclose(y2, y2_ref, atol=2e-2, rtol=2e-2), \
        float(jnp.max(jnp.abs(y2 - y2_ref)))

    # --- with_conv=False ----------------------------------------------------
    y_pool = jax.block_until_ready(downsample(x, with_conv=False))
    y_pool_ref = _ref_avgpool(x)
    assert y_pool.shape == (N, C, H // 2, W // 2), y_pool.shape
    assert jnp.allclose(y_pool, y_pool_ref, atol=1e-3, rtol=1e-3), \
        float(jnp.max(jnp.abs(y_pool - y_pool_ref)))

    # --- with_conv=False, odd spatial dims ----------------------------------
    x3 = jax.random.normal(kx3, (1, 3, 7, 10), dtype=jnp.float32)
    y3 = jax.block_until_ready(downsample(x3, with_conv=False))
    y3_ref = _ref_avgpool(x3)
    assert y3.shape == (1, 3, 3, 5), y3.shape
    assert jnp.allclose(y3, y3_ref, atol=1e-3, rtol=1e-3)

    print("KERNEL_OK")
</pallas_src>

<mosaic_0001>
module attributes {stable_mosaic.version = 11 : i64} {
  func.func @_conv3x3s2_kernel(%arg0: i32, %arg1: i32, %arg2: memref<1x8x9x4xf32, #tpu.memory_space<vmem>>, %arg3: memref<1x1x9x4xf32, #tpu.memory_space<vmem>>, %arg4: memref<1x8x8x4xf32, #tpu.memory_space<vmem>>, %arg5: memref<1x1x8x4xf32, #tpu.memory_space<vmem>>, %arg6: memref<1x8x9x4xf32, #tpu.memory_space<vmem>>, %arg7: memref<1x8x8x4xf32, #tpu.memory_space<vmem>>, %arg8: memref<9x4x4xf32, #tpu.memory_space<vmem>>, %arg9: memref<1x4xf32, #tpu.memory_space<vmem>>, %arg10: memref<1x8x8x4xf32, #tpu.memory_space<vmem>>) attributes {dimension_semantics = [#tpu.dimension_semantics<parallel>, #tpu.dimension_semantics<parallel>], iteration_bounds = array<i64: 2, 1>, scalar_prefetch = 0 : i64, scratch_operands = 0 : i64, tpu.core_type = #tpu.core_type<tc>, window_params = [{transform_indices = @transform_0, window_bounds = array<i64: 1, 8, 9, 4>}, {transform_indices = @transform_1, window_bounds = array<i64: 1, 1, 9, 4>}, {transform_indices = @transform_2, window_bounds = array<i64: 1, 8, 8, 4>}, {transform_indices = @transform_3, window_bounds = array<i64: 1, 1, 8, 4>}, {transform_indices = @transform_4, window_bounds = array<i64: 1, 8, 9, 4>}, {transform_indices = @transform_5, window_bounds = array<i64: 1, 8, 8, 4>}, {pipeline_mode = #tpu.pipeline_mode<synchronous>, transform_indices = @transform_6, window_bounds = array<i64: 9, 4, 4>}, {pipeline_mode = #tpu.pipeline_mode<synchronous>, transform_indices = @transform_7, window_bounds = array<i64: 1, 4>}, {transform_indices = @transform_8, window_bounds = array<i64: 1, 8, 8, 4>}]} {
    %c0 = arith.constant 0 : index
    %c0_0 = arith.constant 0 : index
    %c0_1 = arith.constant 0 : index
    %c0_2 = arith.constant 0 : index
    %0 = vector.load %arg2[%c0, %c0_0, %c0_1, %c0_2] : memref<1x8x9x4xf32, #tpu.memory_space<vmem>>, vector<1x8x9x4xf32>
    %1 = vector.shape_cast %0 : vector<1x8x9x4xf32> to vector<8x9x4xf32>
    %c0_3 = arith.constant 0 : index
    %c0_4 = arith.constant 0 : index
    %c0_5 = arith.constant 0 : index
    %c0_6 = arith.constant 0 : index
    %2 = vector.load %arg4[%c0_3, %c0_4, %c0_5, %c0_6] : memref<1x8x8x4xf32, #tpu.memory_space<vmem>>, vector<1x8x8x4xf32>
    %3 = vector.shape_cast %2 : vector<1x8x8x4xf32> to vector<8x8x4xf32>
    %c0_7 = arith.constant 0 : index
    %c0_8 = arith.constant 0 : index
    %c0_9 = arith.constant 0 : index
    %c0_10 = arith.constant 0 : index
    %4 = vector.load %arg6[%c0_7, %c0_8, %c0_9, %c0_10] : memref<1x8x9x4xf32, #tpu.memory_space<vmem>>, vector<1x8x9x4xf32>
    %5 = vector.shape_cast %4 : vector<1x8x9x4xf32> to vector<8x9x4xf32>
    %c0_11 = arith.constant 0 : index
    %c0_12 = arith.constant 0 : index
    %c0_13 = arith.constant 0 : index
    %c0_14 = arith.constant 0 : index
    %6 = vector.load %arg7[%c0_11, %c0_12, %c0_13, %c0_14] : memref<1x8x8x4xf32, #tpu.memory_space<vmem>>, vector<1x8x8x4xf32>
    %7 = vector.shape_cast %6 : vector<1x8x8x4xf32> to vector<8x8x4xf32>
    %c0_15 = arith.constant 0 : index
    %c0_16 = arith.constant 0 : index
    %8 = vector.load %arg9[%c0_15, %c0_16] : memref<1x4xf32, #tpu.memory_space<vmem>>, vector<1x4xf32>
    %9 = vector.shape_cast %8 : vector<1x4xf32> to vector<1x4xf32>
    %10 = vector.broadcast %9 : vector<1x4xf32> to vector<64x4xf32>
    %11 = vector.extract_strided_slice %1 {offsets = [0, 0, 0], sizes = [8, 8, 4], strides = [1, 1, 1]} : vector<8x9x4xf32> to vector<8x8x4xf32>
    %12 = vector.shape_cast %11 : vector<8x8x4xf32> to vector<64x4xf32>
    %c0_17 = arith.constant 0 : index
    %c0_18 = arith.constant 0 : index
    %c0_19 = arith.constant 0 : index
    %13 = vector.load %arg8[%c0_17, %c0_18, %c0_19] : memref<9x4x4xf32, #tpu.memory_space<vmem>>, vector<1x4x4xf32>
    %14 = vector.shape_cast %13 : vector<1x4x4xf32> to vector<4x4xf32>
    %cst = arith.constant dense<0.000000e+00> : vector<64x4xf32>
    %15 = tpu.matmul %12, %14, %cst {dimension_numbers = #tpu.dot_dimension_numbers<[1], [0], [0], [1], [0, 0, 1, 1], [], []>} : vector<64x4xf32>, vector<4x4xf32>, vector<64x4xf32> -> vector<64x4xf32>
    %16 = arith.addf %10, %15 : vector<64x4xf32>
    %17 = vector.shape_cast %3 : vector<8x8x4xf32> to vector<64x4xf32>
    %c1 = arith.constant 1 : index
    %c0_20 = arith.constant 0 : index
    %c0_21 = arith.constant 0 : index
    %18 = vector.load %arg8[%c1, %c0_20, %c0_21] : memref<9x4x4xf32, #tpu.memory_space<vmem>>, vector<1x4x4xf32>
    %19 = vector.shape_cast %18 : vector<1x4x4xf32> to vector<4x4xf32>
    %cst_22 = arith.constant dense<0.000000e+00> : vector<64x4xf32>
    %20 = tpu.matmul %17, %19, %cst_22 {dimension_numbers = #tpu.dot_dimension_numbers<[1], [0], [0], [1], [0, 0, 1, 1], [], []>} : vector<64x4xf32>, vector<4x4xf32>, vector<64x4xf32> -> vector<64x4xf32>
    %21 = arith.addf %16, %20 : vector<64x4xf32>
    %22 = vector.extract_strided_slice %1 {offsets = [0, 1, 0], sizes = [8, 8, 4], strides = [1, 1, 1]} : vector<8x9x4xf32> to vector<8x8x4xf32>
    %23 = vector.shape_cast %22 : vector<8x8x4xf32> to vector<64x4xf32>
    %c2 = arith.constant 2 : index
    %c0_23 = arith.constant 0 : index
    %c0_24 = arith.constant 0 : index
    %24 = vector.load %arg8[%c2, %c0_23, %c0_24] : memref<9x4x4xf32, #tpu.memory_space<vmem>>, vector<1x4x4xf32>
    %25 = vector.shape_cast %24 : vector<1x4x4xf32> to vector<4x4xf32>
    %cst_25 = arith.constant dense<0.000000e+00> : vector<64x4xf32>
    %26 = tpu.matmul %23, %25, %cst_25 {dimension_numbers = #tpu.dot_dimension_numbers<[1], [0], [0], [1], [0, 0, 1, 1], [], []>} : vector<64x4xf32>, vector<4x4xf32>, vector<64x4xf32> -> vector<64x4xf32>
    %27 = arith.addf %21, %26 : vector<64x4xf32>
    %28 = vector.extract_strided_slice %5 {offsets = [0, 0, 0], sizes = [8, 8, 4], strides = [1, 1, 1]} : vector<8x9x4xf32> to vector<8x8x4xf32>
    %29 = vector.shape_cast %28 : vector<8x8x4xf32> to vector<64x4xf32>
    %c3 = arith.constant 3 : index
    %c0_26 = arith.constant 0 : index
    %c0_27 = arith.constant 0 : index
    %30 = vector.load %arg8[%c3, %c0_26, %c0_27] : memref<9x4x4xf32, #tpu.memory_space<vmem>>, vector<1x4x4xf32>
    %31 = vector.shape_cast %30 : vector<1x4x4xf32> to vector<4x4xf32>
    %cst_28 = arith.constant dense<0.000000e+00> : vector<64x4xf32>
    %32 = tpu.matmul %29, %31, %cst_28 {dimension_numbers = #tpu.dot_dimension_numbers<[1], [0], [0], [1], [0, 0, 1, 1], [], []>} : vector<64x4xf32>, vector<4x4xf32>, vector<64x4xf32> -> vector<64x4xf32>
    %33 = arith.addf %27, %32 : vector<64x4xf32>
    %34 = vector.shape_cast %7 : vector<8x8x4xf32> to vector<64x4xf32>
    %c4 = arith.constant 4 : index
    %c0_29 = arith.constant 0 : index
    %c0_30 = arith.constant 0 : index
    %35 = vector.load %arg8[%c4, %c0_29, %c0_30] : memref<9x4x4xf32, #tpu.memory_space<vmem>>, vector<1x4x4xf32>
    %36 = vector.shape_cast %35 : vector<1x4x4xf32> to vector<4x4xf32>
    %cst_31 = arith.constant dense<0.000000e+00> : vector<64x4xf32>
    %37 = tpu.matmul %34, %36, %cst_31 {dimension_numbers = #tpu.dot_dimension_numbers<[1], [0], [0], [1], [0, 0, 1, 1], [], []>} : vector<64x4xf32>, vector<4x4xf32>, vector<64x4xf32> -> vector<64x4xf32>
    %38 = arith.addf %33, %37 : vector<64x4xf32>
    %39 = vector.extract_strided_slice %5 {offsets = [0, 1, 0], sizes = [8, 8, 4], strides = [1, 1, 1]} : vector<8x9x4xf32> to vector<8x8x4xf32>
    %40 = vector.shape_cast %39 : vector<8x8x4xf32> to vector<64x4xf32>
    %c5 = arith.constant 5 : index
    %c0_32 = arith.constant 0 : index
    %c0_33 = arith.constant 0 : index
    %41 = vector.load %arg8[%c5, %c0_32, %c0_33] : memref<9x4x4xf32, #tpu.memory_space<vmem>>, vector<1x4x4xf32>
    %42 = vector.shape_cast %41 : vector<1x4x4xf32> to vector<4x4xf32>
    %cst_34 = arith.constant dense<0.000000e+00> : vector<64x4xf32>
    %43 = tpu.matmul %40, %42, %cst_34 {dimension_numbers = #tpu.dot_dimension_numbers<[1], [0], [0], [1], [0, 0, 1, 1], [], []>} : vector<64x4xf32>, vector<4x4xf32>, vector<64x4xf32> -> vector<64x4xf32>
    %44 = arith.addf %38, %43 : vector<64x4xf32>
    %c0_35 = arith.constant 0 : index
    %c0_36 = arith.constant 0 : index
    %c0_37 = arith.constant 0 : index
    %c0_38 = arith.constant 0 : index
    %45 = vector.load %arg3[%c0_35, %c0_36, %c0_37, %c0_38] : memref<1x1x9x4xf32, #tpu.memory_space<vmem>>, vector<1x1x9x4xf32>
    %46 = vector.shape_cast %45 : vector<1x1x9x4xf32> to vector<1x9x4xf32>
    %c0_39 = arith.constant 0 : index
    %c0_40 = arith.constant 0 : index
    %c0_41 = arith.constant 0 : index
    %c0_42 = arith.constant 0 : index
    %47 = vector.load %arg5[%c0_39, %c0_40, %c0_41, %c0_42] : memref<1x1x8x4xf32, #tpu.memory_space<vmem>>, vector<1x1x8x4xf32>
    %48 = vector.shape_cast %47 : vector<1x1x8x4xf32> to vector<1x8x4xf32>
    %49 = vector.extract_strided_slice %46 {offsets = [0, 0, 0], sizes = [1, 8, 4], strides = [1, 1, 1]} : vector<1x9x4xf32> to vector<1x8x4xf32>
    %50 = vector.shape_cast %49 : vector<1x8x4xf32> to vector<8x4xf32>
    %c6 = arith.constant 6 : index
    %c0_43 = arith.constant 0 : index
    %c0_44 = arith.constant 0 : index
    %51 = vector.load %arg8[%c6, %c0_43, %c0_44] : memref<9x4x4xf32, #tpu.memory_space<vmem>>, vector<1x4x4xf32>
    %52 = vector.shape_cast %51 : vector<1x4x4xf32> to vector<4x4xf32>
    %cst_45 = arith.constant dense<0.000000e+00> : vector<8x4xf32>
    %53 = tpu.matmul %50, %52, %cst_45 {dimension_numbers = #tpu.dot_dimension_numbers<[1], [0], [0], [1], [0, 0, 1, 1], [], []>} : vector<8x4xf32>, vector<4x4xf32>, vector<8x4xf32> -> vector<8x4xf32>
    %54 = vector.shape_cast %48 : vector<1x8x4xf32> to vector<8x4xf32>
    %c7 = arith.constant 7 : index
    %c0_46 = arith.constant 0 : index
    %c0_47 = arith.constant 0 : index
    %55 = vector.load %arg8[%c7, %c0_46, %c0_47] : memref<9x4x4xf32, #tpu.memory_space<vmem>>, vector<1x4x4xf32>
    %56 = vector.shape_cast %55 : vector<1x4x4xf32> to vector<4x4xf32>
    %cst_48 = arith.constant dense<0.000000e+00> : vector<8x4xf32>
    %57 = tpu.matmul %54, %56, %cst_48 {dimension_numbers = #tpu.dot_dimension_numbers<[1], [0], [0], [1], [0, 0, 1, 1], [], []>} : vector<8x4xf32>, vector<4x4xf32>, vector<8x4xf32> -> vector<8x4xf32>
    %58 = arith.addf %53, %57 : vector<8x4xf32>
    %59 = vector.extract_strided_slice %46 {offsets = [0, 1, 0], sizes = [1, 8, 4], strides = [1, 1, 1]} : vector<1x9x4xf32> to vector<1x8x4xf32>
    %60 = vector.shape_cast %59 : vector<1x8x4xf32> to vector<8x4xf32>
    %c8 = arith.constant 8 : index
    %c0_49 = arith.constant 0 : index
    %c0_50 = arith.constant 0 : index
    %61 = vector.load %arg8[%c8, %c0_49, %c0_50] : memref<9x4x4xf32, #tpu.memory_space<vmem>>, vector<1x4x4xf32>
    %62 = vector.shape_cast %61 : vector<1x4x4xf32> to vector<4x4xf32>
    %cst_51 = arith.constant dense<0.000000e+00> : vector<8x4xf32>
    %63 = tpu.matmul %60, %62, %cst_51 {dimension_numbers = #tpu.dot_dimension_numbers<[1], [0], [0], [1], [0, 0, 1, 1], [], []>} : vector<8x4xf32>, vector<4x4xf32>, vector<8x4xf32> -> vector<8x4xf32>
    %64 = arith.addf %58, %63 : vector<8x4xf32>
    %65 = vector.extract_strided_slice %1 {offsets = [1, 0, 0], sizes = [7, 8, 4], strides = [1, 1, 1]} : vector<8x9x4xf32> to vector<7x8x4xf32>
    %66 = vector.shape_cast %65 : vector<7x8x4xf32> to vector<56x4xf32>
    %c6_52 = arith.constant 6 : index
    %c0_53 = arith.constant 0 : index
    %c0_54 = arith.constant 0 : index
    %67 = vector.load %arg8[%c6_52, %c0_53, %c0_54] : memref<9x4x4xf32, #tpu.memory_space<vmem>>, vector<1x4x4xf32>
    %68 = vector.shape_cast %67 : vector<1x4x4xf32> to vector<4x4xf32>
    %cst_55 = arith.constant dense<0.000000e+00> : vector<56x4xf32>
    %69 = tpu.matmul %66, %68, %cst_55 {dimension_numbers = #tpu.dot_dimension_numbers<[1], [0], [0], [1], [0, 0, 1, 1], [], []>} : vector<56x4xf32>, vector<4x4xf32>, vector<56x4xf32> -> vector<56x4xf32>
    %70 = vector.extract_strided_slice %3 {offsets = [1, 0, 0], sizes = [7, 8, 4], strides = [1, 1, 1]} : vector<8x8x4xf32> to vector<7x8x4xf32>
    %71 = vector.shape_cast %70 : vector<7x8x4xf32> to vector<56x4xf32>
    %c7_56 = arith.constant 7 : index
    %c0_57 = arith.constant 0 : index
    %c0_58 = arith.constant 0 : index
    %72 = vector.load %arg8[%c7_56, %c0_57, %c0_58] : memref<9x4x4xf32, #tpu.memory_space<vmem>>, vector<1x4x4xf32>
    %73 = vector.shape_cast %72 : vector<1x4x4xf32> to vector<4x4xf32>
    %cst_59 = arith.constant dense<0.000000e+00> : vector<56x4xf32>
    %74 = tpu.matmul %71, %73, %cst_59 {dimension_numbers = #tpu.dot_dimension_numbers<[1], [0], [0], [1], [0, 0, 1, 1], [], []>} : vector<56x4xf32>, vector<4x4xf32>, vector<56x4xf32> -> vector<56x4xf32>
    %75 = arith.addf %69, %74 : vector<56x4xf32>
    %76 = vector.extract_strided_slice %1 {offsets = [1, 1, 0], sizes = [7, 8, 4], strides = [1, 1, 1]} : vector<8x9x4xf32> to vector<7x8x4xf32>
    %77 = vector.shape_cast %76 : vector<7x8x4xf32> to vector<56x4xf32>
    %c8_60 = arith.constant 8 : index
    %c0_61 = arith.constant 0 : index
    %c0_62 = arith.constant 0 : index
    %78 = vector.load %arg8[%c8_60, %c0_61, %c0_62] : memref<9x4x4xf32, #tpu.memory_space<vmem>>, vector<1x4x4xf32>
    %79 = vector.shape_cast %78 : vector<1x4x4xf32> to vector<4x4xf32>
    %cst_63 = arith.constant dense<0.000000e+00> : vector<56x4xf32>
    %80 = tpu.matmul %77, %79, %cst_63 {dimension_numbers = #tpu.dot_dimension_numbers<[1], [0], [0], [1], [0, 0, 1, 1], [], []>} : vector<56x4xf32>, vector<4x4xf32>, vector<56x4xf32> -> vector<56x4xf32>
    %81 = arith.addf %75, %80 : vector<56x4xf32>
    %82 = vector.extract_strided_slice %44 {offsets = [0, 0], sizes = [56, 4], strides = [1, 1]} : vector<64x4xf32> to vector<56x4xf32>
    %83 = arith.addf %82, %81 : vector<56x4xf32>
    %84 = vector.shape_cast %83 : vector<56x4xf32> to vector<7x8x4xf32>
    %c0_64 = arith.constant 0 : index
    %c0_65 = arith.constant 0 : index
    %c0_66 = arith.constant 0 : index
    %c0_67 = arith.constant 0 : index
    %85 = vector.load %arg10[%c0_64, %c0_65, %c0_66, %c0_67] : memref<1x8x8x4xf32, #tpu.memory_space<vmem>>, vector<1x7x8x4xf32>
    %86 = vector.shape_cast %85 : vector<1x7x8x4xf32> to vector<7x8x4xf32>
    %87 = vector.shape_cast %84 : vector<7x8x4xf32> to vector<1x7x8x4xf32>
    tpu.vector_store %arg10[%c0_64, %c0_65, %c0_66, %c0_67], %87 {strides = array<i32>} : memref<1x8x8x4xf32, #tpu.memory_space<vmem>>, vector<1x7x8x4xf32>,
    %88 = vector.extract_strided_slice %44 {offsets = [56, 0], sizes = [8, 4], strides = [1, 1]} : vector<64x4xf32> to vector<8x4xf32>
    %89 = arith.addf %88, %64 : vector<8x4xf32>
    %c0_68 = arith.constant 0 : index
    %c7_69 = arith.constant 7 : index
    %c0_70 = arith.constant 0 : index
    %c0_71 = arith.constant 0 : index
    %90 = vector.load %arg10[%c0_68, %c7_69, %c0_70, %c0_71] : memref<1x8x8x4xf32, #tpu.memory_space<vmem>>, vector<1x1x8x4xf32>
    %91 = vector.shape_cast %90 : vector<1x1x8x4xf32> to vector<8x4xf32>
    %92 = vector.shape_cast %89 : vector<8x4xf32> to vector<1x1x8x4xf32>
    tpu.vector_store %arg10[%c0_68, %c7_69, %c0_70, %c0_71], %92 {strides = array<i32>} : memref<1x8x8x4xf32, #tpu.memory_space<vmem>>, vector<1x1x8x4xf32>,
    return
  }
  func.func @transform_0(%arg0: i32, %arg1: i32) -> (i32, i32, i32, i32) {
    %c0_i32 = arith.constant 0 : i32
    %c0_i32_0 = arith.constant 0 : i32
    %c0_i32_1 = arith.constant 0 : i32
    return %arg0, %arg1, %c0_i32, %c0_i32_0 : i32, i32, i32, i32
  }
  func.func @transform_1(%arg0: i32, %arg1: i32) -> (i32, i32, i32, i32) {
    %c8_i32 = arith.constant 8 : i32
    %0 = arith.muli %arg1, %c8_i32 : i32
    %c8_i32_0 = arith.constant 8 : i32
    %1 = arith.addi %0, %c8_i32_0 : i32
    %c8_i32_1 = arith.constant 8 : i32
    %2 = arith.minsi %1, %c8_i32_1 : i32
    %c0_i32 = arith.constant 0 : i32
    %c0_i32_2 = arith.constant 0 : i32
    %c0_i32_3 = arith.constant 0 : i32
    return %arg0, %2, %c0_i32, %c0_i32_2 : i32, i32, i32, i32
  }
  func.func @transform_2(%arg0: i32, %arg1: i32) -> (i32, i32, i32, i32) {
    %c0_i32 = arith.constant 0 : i32
    %c0_i32_0 = arith.constant 0 : i32
    %c0_i32_1 = arith.constant 0 : i32
    return %arg0, %arg1, %c0_i32, %c0_i32_0 : i32, i32, i32, i32
  }
  func.func @transform_3(%arg0: i32, %arg1: i32) -> (i32, i32, i32, i32) {
    %c8_i32 = arith.constant 8 : i32
    %0 = arith.muli %arg1, %c8_i32 : i32
    %c8_i32_0 = arith.constant 8 : i32
    %1 = arith.addi %0, %c8_i32_0 : i32
    %c8_i32_1 = arith.constant 8 : i32
    %2 = arith.minsi %1, %c8_i32_1 : i32
    %c0_i32 = arith.constant 0 : i32
    %c0_i32_2 = arith.constant 0 : i32
    %c0_i32_3 = arith.constant 0 : i32
    return %arg0, %2, %c0_i32, %c0_i32_2 : i32, i32, i32, i32
  }
  func.func @transform_4(%arg0: i32, %arg1: i32) -> (i32, i32, i32, i32) {
    %c0_i32 = arith.constant 0 : i32
    %c0_i32_0 = arith.constant 0 : i32
    %c0_i32_1 = arith.constant 0 : i32
    return %arg0, %arg1, %c0_i32, %c0_i32_0 : i32, i32, i32, i32
  }
  func.func @transform_5(%arg0: i32, %arg1: i32) -> (i32, i32, i32, i32) {
    %c0_i32 = arith.constant 0 : i32
    %c0_i32_0 = arith.constant 0 : i32
    %c0_i32_1 = arith.constant 0 : i32
    return %arg0, %arg1, %c0_i32, %c0_i32_0 : i32, i32, i32, i32
  }
  func.func @transform_6(%arg0: i32, %arg1: i32) -> (i32, i32, i32) {
    %c0_i32 = arith.constant 0 : i32
    %c0_i32_0 = arith.constant 0 : i32
    %c0_i32_1 = arith.constant 0 : i32
    %c0_i32_2 = arith.constant 0 : i32
    return %c0_i32, %c0_i32_0, %c0_i32_1 : i32, i32, i32
  }
  func.func @transform_7(%arg0: i32, %arg1: i32) -> (i32, i32) {
    %c0_i32 = arith.constant 0 : i32
    %c0_i32_0 = arith.constant 0 : i32
    %c0_i32_1 = arith.constant 0 : i32
    return %c0_i32, %c0_i32_0 : i32, i32
  }
  func.func @transform_8(%arg0: i32, %arg1: i32) -> (i32, i32, i32, i32) {
    %c0_i32 = arith.constant 0 : i32
    %c0_i32_0 = arith.constant 0 : i32
    %c0_i32_1 = arith.constant 0 : i32
    return %arg0, %arg1, %c0_i32, %c0_i32_0 : i32, i32, i32, i32
  }
}

</mosaic_0001>

<llo_original>
// kernel: downsample_conv.1
$region0: #{downsample_conv.1}
  #allocation0 [shape = 'u32[]', space=smem, size = 0x4, offset = 0x4, fixed_abs, tag = 'smem constant byte address 0x4 - core index']
  #allocation1 [shape = 'u32[144,128]{1,0:T(1,128)}', space=vmem, size = 0x12000, scoped, tag = 'internal scratch']
  %s0 = inlined_call_operand.vmem [shape: f32[2,9,9,4], index: 0, kind: input, shape index: {}, may-alias: {0,1}]
  %s1 = inlined_call_operand.vmem [shape: f32[2,9,9,4], index: 1, kind: input, shape index: {}, may-alias: {0,1}]
  %s2 = inlined_call_operand.vmem [shape: f32[2,9,8,4], index: 2, kind: input, shape index: {}, may-alias: {2,3}]
  %s3 = inlined_call_operand.vmem [shape: f32[2,9,8,4], index: 3, kind: input, shape index: {}, may-alias: {2,3}]
  %s4 = inlined_call_operand.vmem [shape: f32[2,8,9,4], index: 4, kind: input, shape index: {}]
  %s5 = inlined_call_operand.vmem [shape: f32[2,8,8,4], index: 5, kind: input, shape index: {}]
  %s6 = inlined_call_operand.vmem [shape: f32[9,4,4], index: 6, kind: input, shape index: {}]
  %s7 = inlined_call_operand.vmem [shape: f32[1,4], index: 7, kind: input, shape index: {}]
  %s8 = inlined_call_operand.vmem [shape: f32[2,8,8,4], index: 8, kind: output, shape index: {}]
  %s9 = sld [smem:[#allocation0]]
  $region65: #{downsample_conv.1} parent=0
    _
  %s11 = ssub.s32 1, %s9
  %s12 = scalar_select 0, %s11, %s9
  loop: start=0, step=1, limit=4
  $region2: #{downsample_conv.1} parent=0 // loop_pre_header
    _
  $region3: #{downsample_conv.1} parent=0 // loop_header
    %s14 = sphi 0, %s18
    %p15 = scmp.ge.s32.totalorder %s14, 4
    %s21 = sphi 0, %s33
    %s22 = sphi 0, %s29
    %s23 = sphi 0, %s21
    %s24 = sphi 0, %s22
    %s25 = sphi 0, %s23
    %s26 = sphi 0, %s24
    %s38 = sphi 0, %s40
    %s41 = sphi 0, %s38
    %s42 = sphi 0, %s41
    %s58 = sphi 0, %s42
    %s74 = sphi 0, %s76
    %s77 = sphi 0, %s74
    %s78 = sphi 0, %s77
    %s94 = sphi 0, %s78
    %s102 = sphi 0, %s104
    %s105 = sphi 0, %s102
    %s106 = sphi 0, %s105
    %s122 = sphi 0, %s106
    %s138 = sphi 0, %s140
    %s141 = sphi 0, %s138
    %s142 = sphi 0, %s141
    %s158 = sphi 0, %s142
    %s166 = sphi 0, %s168
    %s169 = sphi 0, %s166
    %s170 = sphi 0, %s169
    %s186 = sphi 0, %s170
    %s194 = sphi 0, %s196
    %s197 = sphi 0, %s194
    %s198 = sphi 0, %s197
    %s214 = sphi 0, %s198
    %s218 = sphi 0, %s218
    %s220 = sphi 0, %s218
    %s221 = sphi 0, %s220
    %s235 = sphi 0, %s221
    %s239 = sphi 0, %s239
    %s241 = sphi 0, %s239
    %s242 = sphi 0, %s241
    %s256 = sphi 0, %s242
    %s264 = sphi 0, %s266
    %s267 = sphi 0, %s264
    %s268 = sphi 0, %s267
    %s284 = sphi 0, %s268
  $region4: #{downsample_conv.1} parent=0 // loop_header_branch
    %17 = sbr.rel (%p15) target = $region8
  $region5: #{downsample_conv.1} parent=0 // loop_body
    %s19 = ssub.s32 %s14, 1
    %s20 = ssub.s32 %s14, 2
    %s27 = sadd.s32 1, %s22
    %p28 = scmp.ge.s32.totalorder %s27, 1
    %s29 = scalar_select %p28, 0, %s27
    %s30 = sadd.s32 1, %s21
    %s31 = scalar_select %p28, %s30, %s21
    %p32 = scmp.ge.s32.totalorder %s31, 2
    %s33 = scalar_select %p32, 0, %s31
    %s34 = ssub.s32 %s21, %s33
    %s35 = ssub.s32 %s22, %s29
    %s36 = sor.u32 %s34, %s35
    %p37 = scmp.eq.s32.totalorder %s36, 0
    %s39 = sadd.s32 %s38, 1
    %s40 = scalar_select %p37, %s38, %s39
    %p43 = pneg %p37
    %p44 = scmp.eq.s32.totalorder %s14, 1
    %p45 = por %p43, %p44
    %p46 = scmp.ne.s32.totalorder %s38, %s41
    %p47 = scmp.eq.s32.totalorder %s14, 0
    %p48 = por %p46, %p47
    %p49 = scmp.ne.s32.totalorder %s38, %s41
    %p50 = scmp.eq.s32.totalorder %s19, 1
    %p51 = por %p49, %p50
    %p52 = scmp.ne.s32.totalorder %s41, %s42
    %p53 = scmp.eq.s32.totalorder %s19, 0
    %p54 = por %p52, %p53
    %p55 = scmp.ne.s32.totalorder %s41, %s42
    %p56 = scmp.eq.s32.totalorder %s20, 1
    %p57 = por %p55, %p56
    %p59 = scmp.ne.s32.totalorder %s42, %s58
    %p60 = scmp.eq.s32.totalorder %s20, 0
    %p61 = por %p59, %p60
    %s62 = smul.u32 %s22, 8
    %s63 = sadd.s32 %s62, 8
    %p64 = scmp.lt.s32.totalorder %s63, 8
    %s65 = scalar_select %p64, %s63, 8
    %s66 = smul.u32 %s29, 8
    %s67 = sadd.s32 %s66, 8
    %p68 = scmp.lt.s32.totalorder %s67, 8
    %s69 = scalar_select %p68, %s67, 8
    %s70 = ssub.s32 %s21, %s33
    %s71 = ssub.s32 %s65, %s69
    %s72 = sor.u32 %s70, %s71
    %p73 = scmp.eq.s32.totalorder %s72, 0
    %s75 = sadd.s32 %s74, 1
    %s76 = scalar_select %p73, %s74, %s75
    %p79 = pneg %p73
    %p80 = scmp.eq.s32.totalorder %s14, 1
    %p81 = por %p79, %p80
    %p82 = scmp.ne.s32.totalorder %s74, %s77
    %p83 = scmp.eq.s32.totalorder %s14, 0
    %p84 = por %p82, %p83
    %p85 = scmp.ne.s32.totalorder %s74, %s77
    %p86 = scmp.eq.s32.totalorder %s19, 1
    %p87 = por %p85, %p86
    %p88 = scmp.ne.s32.totalorder %s77, %s78
    %p89 = scmp.eq.s32.totalorder %s19, 0
    %p90 = por %p88, %p89
    %p91 = scmp.ne.s32.totalorder %s77, %s78
    %p92 = scmp.eq.s32.totalorder %s20, 1
    %p93 = por %p91, %p92
    %p95 = scmp.ne.s32.totalorder %s78, %s94
    %p96 = scmp.eq.s32.totalorder %s20, 0
    %p97 = por %p95, %p96
    %s98 = ssub.s32 %s21, %s33
    %s99 = ssub.s32 %s22, %s29
    %s100 = sor.u32 %s98, %s99
    %p101 = scmp.eq.s32.totalorder %s100, 0
    %s103 = sadd.s32 %s102, 1
    %s104 = scalar_select %p101, %s102, %s103
    %p107 = pneg %p101
    %p108 = scmp.eq.s32.totalorder %s14, 1
    %p109 = por %p107, %p108
    %p110 = scmp.ne.s32.totalorder %s102, %s105
    %p111 = scmp.eq.s32.totalorder %s14, 0
    %p112 = por %p110, %p111
    %p113 = scmp.ne.s32.totalorder %s102, %s105
    %p114 = scmp.eq.s32.totalorder %s19, 1
    %p115 = por %p113, %p114
    %p116 = scmp.ne.s32.totalorder %s105, %s106
    %p117 = scmp.eq.s32.totalorder %s19, 0
    %p118 = por %p116, %p117
    %p119 = scmp.ne.s32.totalorder %s105, %s106
    %p120 = scmp.eq.s32.totalorder %s20, 1
    %p121 = por %p119, %p120
    %p123 = scmp.ne.s32.totalorder %s106, %s122
    %p124 = scmp.eq.s32.totalorder %s20, 0
    %p125 = por %p123, %p124
    %s126 = smul.u32 %s22, 8
    %s127 = sadd.s32 %s126, 8
    %p128 = scmp.lt.s32.totalorder %s127, 8
    %s129 = scalar_select %p128, %s127, 8
    %s130 = smul.u32 %s29, 8
    %s131 = sadd.s32 %s130, 8
    %p132 = scmp.lt.s32.totalorder %s131, 8
    %s133 = scalar_select %p132, %s131, 8
    %s134 = ssub.s32 %s21, %s33
    %s135 = ssub.s32 %s129, %s133
    %s136 = sor.u32 %s134, %s135
    %p137 = scmp.eq.s32.totalorder %s136, 0
    %s139 = sadd.s32 %s138, 1
    %s140 = scalar_select %p137, %s138, %s139
    %p143 = pneg %p137
    %p144 = scmp.eq.s32.totalorder %s14, 1
    %p145 = por %p143, %p144
    %p146 = scmp.ne.s32.totalorder %s138, %s141
    %p147 = scmp.eq.s32.totalorder %s14, 0
    %p148 = por %p146, %p147
    %p149 = scmp.ne.s32.totalorder %s138, %s141
    %p150 = scmp.eq.s32.totalorder %s19, 1
    %p151 = por %p149, %p150
    %p152 = scmp.ne.s32.totalorder %s141, %s142
    %p153 = scmp.eq.s32.totalorder %s19, 0
    %p154 = por %p152, %p153
    %p155 = scmp.ne.s32.totalorder %s141, %s142
    %p156 = scmp.eq.s32.totalorder %s20, 1
    %p157 = por %p155, %p156
    %p159 = scmp.ne.s32.totalorder %s142, %s158
    %p160 = scmp.eq.s32.totalorder %s20, 0
    %p161 = por %p159, %p160
    %s162 = ssub.s32 %s21, %s33
    %s163 = ssub.s32 %s22, %s29
    %s164 = sor.u32 %s162, %s163
    %p165 = scmp.eq.s32.totalorder %s164, 0
    %s167 = sadd.s32 %s166, 1
    %s168 = scalar_select %p165, %s166, %s167
    %p171 = pneg %p165
    %p172 = scmp.eq.s32.totalorder %s14, 1
    %p173 = por %p171, %p172
    %p174 = scmp.ne.s32.totalorder %s166, %s169
    %p175 = scmp.eq.s32.totalorder %s14, 0
    %p176 = por %p174, %p175
    %p177 = scmp.ne.s32.totalorder %s166, %s169
    %p178 = scmp.eq.s32.totalorder %s19, 1
    %p179 = por %p177, %p178
    %p180 = scmp.ne.s32.totalorder %s169, %s170
    %p181 = scmp.eq.s32.totalorder %s19, 0
    %p182 = por %p180, %p181
    %p183 = scmp.ne.s32.totalorder %s169, %s170
    %p184 = scmp.eq.s32.totalorder %s20, 1
    %p185 = por %p183, %p184
    %p187 = scmp.ne.s32.totalorder %s170, %s186
    %p188 = scmp.eq.s32.totalorder %s20, 0
    %p189 = por %p187, %p188
    %s190 = ssub.s32 %s21, %s33
    %s191 = ssub.s32 %s22, %s29
    %s192 = sor.u32 %s190, %s191
    %p193 = scmp.eq.s32.totalorder %s192, 0
    %s195 = sadd.s32 %s194, 1
    %s196 = scalar_select %p193, %s194, %s195
    %p199 = pneg %p193
    %p200 = scmp.eq.s32.totalorder %s14, 1
    %p201 = por %p199, %p200
    %p202 = scmp.ne.s32.totalorder %s194, %s197
    %p203 = scmp.eq.s32.totalorder %s14, 0
    %p204 = por %p202, %p203
    %p205 = scmp.ne.s32.totalorder %s194, %s197
    %p206 = scmp.eq.s32.totalorder %s19, 1
    %p207 = por %p205, %p206
    %p208 = scmp.ne.s32.totalorder %s197, %s198
    %p209 = scmp.eq.s32.totalorder %s19, 0
    %p210 = por %p208, %p209
    %p211 = scmp.ne.s32.totalorder %s197, %s198
    %p212 = scmp.eq.s32.totalorder %s20, 1
    %p213 = por %p211, %p212
    %p215 = scmp.ne.s32.totalorder %s198, %s214
    %p216 = scmp.eq.s32.totalorder %s20, 0
    %p217 = por %p215, %p216
    %s219 = sadd.s32 %s218, 1
    %p222 = scmp.eq.s32.totalorder %s14, 1
    %p223 = scmp.ne.s32.totalorder %s218, %s220
    %p224 = scmp.eq.s32.totalorder %s14, 0
    %p225 = por %p223, %p224
    %p226 = scmp.ne.s32.totalorder %s218, %s220
    %p227 = scmp.eq.s32.totalorder %s19, 1
    %p228 = por %p226, %p227
    %p229 = scmp.ne.s32.totalorder %s220, %s221
    %p230 = scmp.eq.s32.totalorder %s19, 0
    %p231 = por %p229, %p230
    %p232 = scmp.ne.s32.totalorder %s220, %s221
    %p233 = scmp.eq.s32.totalorder %s20, 1
    %p234 = por %p232, %p233
    %p236 = scmp.ne.s32.totalorder %s221, %s235
    %p237 = scmp.eq.s32.totalorder %s20, 0
    %p238 = por %p236, %p237
    %s240 = sadd.s32 %s239, 1
    %p243 = scmp.eq.s32.totalorder %s14, 1
    %p244 = scmp.ne.s32.totalorder %s239, %s241
    %p245 = scmp.eq.s32.totalorder %s14, 0
    %p246 = por %p244, %p245
    %p247 = scmp.ne.s32.totalorder %s239, %s241
    %p248 = scmp.eq.s32.totalorder %s19, 1
    %p249 = por %p247, %p248
    %p250 = scmp.ne.s32.totalorder %s241, %s242
    %p251 = scmp.eq.s32.totalorder %s19, 0
    %p252 = por %p250, %p251
    %p253 = scmp.ne.s32.totalorder %s241, %s242
    %p254 = scmp.eq.s32.totalorder %s20, 1
    %p255 = por %p253, %p254
    %p257 = scmp.ne.s32.totalorder %s242, %s256
    %p258 = scmp.eq.s32.totalorder %s20, 0
    %p259 = por %p257, %p258
    %s260 = ssub.s32 %s21, %s33
    %s261 = ssub.s32 %s22, %s29
    %s262 = sor.u32 %s260, %s261
    %p263 = scmp.eq.s32.totalorder %s262, 0
    %s265 = sadd.s32 %s264, 1
    %s266 = scalar_select %p263, %s264, %s265
    %p269 = pneg %p263
    %p270 = scmp.eq.s32.totalorder %s14, 1
    %p271 = por %p269, %p270
    %p272 = scmp.ne.s32.totalorder %s264, %s267
    %p273 = scmp.eq.s32.totalorder %s14, 0
    %p274 = por %p272, %p273
    %p275 = scmp.ne.s32.totalorder %s264, %s267
    %p276 = scmp.eq.s32.totalorder %s19, 1
    %p277 = por %p275, %p276
    %p278 = scmp.ne.s32.totalorder %s267, %s268
    %p279 = scmp.eq.s32.totalorder %s19, 0
    %p280 = por %p278, %p279
    %p281 = scmp.ne.s32.totalorder %s267, %s268
    %p282 = scmp.eq.s32.totalorder %s20, 1
    %p283 = por %p281, %p282
    %p285 = scmp.ne.s32.totalorder %s268, %s284
    %p286 = scmp.eq.s32.totalorder %s20, 0
    %p287 = por %p285, %p286
    %p288 = scmp.le.s32.totalorder 1, %s14
    %p289 = scmp.lt.s32.totalorder %s14, 3
    %p290 = pnand %p288, %p289
    %p291 = pneg %p290
    // Predicated region
    $region9: #{downsample_conv.1} parent=5 // pred_check
      _
    $region10: #{downsample_conv.1} parent=5 // pred_check_branch
      %293 = sbr.rel (%p290) target = $region12
    $region11: #{downsample_conv.1} parent=5 // pred_region
      %s294 = ssub.s32 %s14, 1
      // Predicated region
      $region13: #{downsample_conv.1} parent=11 // pred_check
        %p295 = pneg %p231
      $region14: #{downsample_conv.1} parent=11 // pred_check_branch
        %297 = sbr.rel (%p295) target = $region16
      $region15: #{downsample_conv.1} parent=11 // pred_region
        _
      $region16: #{downsample_conv.1} parent=11 // pred_fallthru
        _
      // Predicated region
      $region17: #{downsample_conv.1} parent=11 // pred_check
        %p298 = pneg %p252
      $region18: #{downsample_conv.1} parent=11 // pred_check_branch
        %300 = sbr.rel (%p298) target = $region20
      $region19: #{downsample_conv.1} parent=11 // pred_region
        _
      $region20: #{downsample_conv.1} parent=11 // pred_fallthru
        _
    $region12: #{downsample_conv.1} parent=5 // pred_fallthru
      _
    %p301 = scmp.lt.s32.totalorder %s14, 2
    // Predicated region
    $region21: #{downsample_conv.1} parent=5 // pred_check
      %p302 = pneg %p301
    $region22: #{downsample_conv.1} parent=5 // pred_check_branch
      %304 = sbr.rel (%p302) target = $region24
    $region23: #{downsample_conv.1} parent=5 // pred_region
      // Predicated region
      $region25: #{downsample_conv.1} parent=23 // pred_check
        %p305 = pneg %p48
      $region26: #{downsample_conv.1} parent=23 // pred_check_branch
        %307 = sbr.rel (%p305) target = $region28
      $region27: #{downsample_conv.1} parent=23 // pred_region
        %s308 = smul.u32 8, %s22
        %s309 = ssub.s32 9, %s308
        %p310 = scmp.lt.s32.totalorder %s309, 8
        %s311 = scalar_select %p310, %s309, 8
        %s312 = smul.u32 128, %s311
        %s313 = smul.u32 %s312, 2
        %p314 = scmp.lt.s32.totalorder %s21, 1
        %s315 = scalar_select %p314, %s21, 1
        %p316 = scmp.lt.s32.totalorder %s308, 8
        %s317 = scalar_select %p316, %s308, 8
        %s318 = smul.addr %s317, 2
        %s319 = smul.addr %s315, 18
        %s320 = sadd.s32 %s318, %s319
        %s321 = smul.addr %s320, 8
        %s322 = scalar_lea.vmem %s0, %s321
        %s323 = smul.u32 8, %s22
        %s324 = ssub.s32 9, %s323
        %p325 = scmp.lt.s32.totalorder %s324, 8
        %s326 = scalar_select %p325, %s324, 8
        %s327 = smul.u32 128, %s326
        %s328 = smul.u32 %s327, 2
      $region28: #{downsample_conv.1} parent=23 // pred_fallthru
        _
      // Predicated region
      $region29: #{downsample_conv.1} parent=23 // pred_check
        %p329 = pneg %p84
      $region30: #{downsample_conv.1} parent=23 // pred_check_branch
        %331 = sbr.rel (%p329) target = $region32
      $region31: #{downsample_conv.1} parent=23 // pred_region
        %s332 = smul.u32 %s22, 8
        %s333 = sadd.s32 %s332, 8
        %p334 = scmp.lt.s32.totalorder %s333, 8
        %s335 = scalar_select %p334, %s333, 8
        %p336 = scmp.lt.s32.totalorder %s21, 1
        %s337 = scalar_select %p336, %s21, 1
        %p338 = scmp.lt.s32.totalorder %s335, 8
        %s339 = scalar_select %p338, %s335, 8
        %s340 = smul.addr %s339, 2
        %s341 = smul.addr %s337, 18
        %s342 = sadd.s32 %s340, %s341
        %s343 = smul.addr %s342, 8
        %s344 = scalar_lea.vmem %s1, %s343
        %s345 = smul.u32 %s22, 8
        %s346 = sadd.s32 %s345, 8
        %p347 = scmp.lt.s32.totalorder %s346, 8
        %s348 = scalar_select %p347, %s346, 8
      $region32: #{downsample_conv.1} parent=23 // pred_fallthru
        _
      // Predicated region
      $region33: #{downsample_conv.1} parent=23 // pred_check
        %p349 = pneg %p112
      $region34: #{downsample_conv.1} parent=23 // pred_check_branch
        %351 = sbr.rel (%p349) target = $region36
      $region35: #{downsample_conv.1} parent=23 // pred_region
        %s352 = smul.u32 8, %s22
        %s353 = ssub.s32 9, %s352
        %p354 = scmp.lt.s32.totalorder %s353, 8
        %s355 = scalar_select %p354, %s353, 8
        %s356 = smul.u32 128, %s355
        %p357 = scmp.lt.s32.totalorder %s21, 1
        %s358 = scalar_select %p357, %s21, 1
        %p359 = scmp.lt.s32.totalorder %s352, 8
        %s360 = scalar_select %p359, %s352, 8
        %s361 = smul.addr %s358, 9
        %s362 = sadd.s32 %s360, %s361
        %s363 = smul.addr %s362, 8
        %s364 = scalar_lea.vmem %s2, %s363
        %s365 = smul.u32 8, %s22
        %s366 = ssub.s32 9, %s365
        %p367 = scmp.lt.s32.totalorder %s366, 8
        %s368 = scalar_select %p367, %s366, 8
        %s369 = smul.u32 128, %s368
      $region36: #{downsample_conv.1} parent=23 // pred_fallthru
        _
      // Predicated region
      $region37: #{downsample_conv.1} parent=23 // pred_check
        %p370 = pneg %p148
      $region38: #{downsample_conv.1} parent=23 // pred_check_branch
        %372 = sbr.rel (%p370) target = $region40
      $region39: #{downsample_conv.1} parent=23 // pred_region
        %s373 = smul.u32 %s22, 8
        %s374 = sadd.s32 %s373, 8
        %p375 = scmp.lt.s32.totalorder %s374, 8
        %s376 = scalar_select %p375, %s374, 8
        %p377 = scmp.lt.s32.totalorder %s21, 1
        %s378 = scalar_select %p377, %s21, 1
        %p379 = scmp.lt.s32.totalorder %s376, 8
        %s380 = scalar_select %p379, %s376, 8
        %s381 = smul.addr %s378, 9
        %s382 = sadd.s32 %s380, %s381
        %s383 = smul.addr %s382, 8
        %s384 = scalar_lea.vmem %s3, %s383
        %s385 = smul.u32 %s22, 8
        %s386 = sadd.s32 %s385, 8
        %p387 = scmp.lt.s32.totalorder %s386, 8
        %s388 = scalar_select %p387, %s386, 8
      $region40: #{downsample_conv.1} parent=23 // pred_fallthru
        _
      // Predicated region
      $region41: #{downsample_conv.1} parent=23 // pred_check
        %p389 = pneg %p176
      $region42: #{downsample_conv.1} parent=23 // pred_check_branch
        %391 = sbr.rel (%p389) target = $region44
      $region43: #{downsample_conv.1} parent=23 // pred_region
        %s392 = smul.u32 8, %s22
        %p393 = scmp.lt.s32.totalorder %s21, 1
        %s394 = scalar_select %p393, %s21, 1
        %p395 = scmp.lt.s32.totalorder %s392, 7
        %s396 = scalar_select %p395, %s392, 7
        %s397 = smul.addr %s396, 2
        %s398 = smul.addr %s394, 16
        %s399 = sadd.s32 %s397, %s398
        %s400 = smul.addr %s399, 8
        %s401 = scalar_lea.vmem %s4, %s400
        %s402 = smul.u32 8, %s22
      $region44: #{downsample_conv.1} parent=23 // pred_fallthru
        _
      // Predicated region
      $region45: #{downsample_conv.1} parent=23 // pred_check
        %p403 = pneg %p204
      $region46: #{downsample_conv.1} parent=23 // pred_check_branch
        %405 = sbr.rel (%p403) target = $region48
      $region47: #{downsample_conv.1} parent=23 // pred_region
        %s406 = smul.u32 8, %s22
        %p407 = scmp.lt.s32.totalorder %s21, 1
        %s408 = scalar_select %p407, %s21, 1
        %p409 = scmp.lt.s32.totalorder %s406, 7
        %s410 = scalar_select %p409, %s406, 7
        %s411 = smul.addr %s408, 8
        %s412 = sadd.s32 %s410, %s411
        %s413 = smul.addr %s412, 8
        %s414 = scalar_lea.vmem %s5, %s413
        %s415 = smul.u32 8, %s22
      $region48: #{downsample_conv.1} parent=23 // pred_fallthru
        _
    $region24: #{downsample_conv.1} parent=5 // pred_fallthru
      _
    %p416 = scmp.le.s32.totalorder 1, %s14
    %p417 = scmp.lt.s32.totalorder %s14, 3
    %p418 = pnand %p416, %p417
    %p419 = pneg %p418
    // Predicated region
    $region49: #{downsample_conv.1} parent=5 // pred_check
      _
    $region50: #{downsample_conv.1} parent=5 // pred_check_branch
      %421 = sbr.rel (%p418) target = $region52
    $region51: #{downsample_conv.1} parent=5 // pred_region
      %s422 = ssub.s32 %s14, 1
      %s423 = smul.u32 8, %s24
      %s424 = ssub.s32 9, %s423
      %p425 = scmp.lt.s32.totalorder %s424, 8
      %s426 = scalar_select %p425, %s424, 8
      %s427 = smul.u32 128, %s426
      %s428 = smul.u32 %s427, 2
      %p429 = scmp.lt.s32.totalorder %s23, 1
      %s430 = scalar_select %p429, %s23, 1
      %p431 = scmp.lt.s32.totalorder %s423, 8
      %s432 = scalar_select %p431, %s423, 8
      %s433 = smul.addr %s432, 2
      %s434 = smul.addr %s430, 18
      %s435 = sadd.s32 %s433, %s434
      %s436 = smul.addr %s435, 8
      %s437 = scalar_lea.vmem %s0, %s436
      %p438 = pneg %p54
      %p439 = pneg %p51
      %s440 = smul.u32 %s24, 8
      %s441 = sadd.s32 %s440, 8
      %p442 = scmp.lt.s32.totalorder %s441, 8
      %s443 = scalar_select %p442, %s441, 8
      %p444 = scmp.lt.s32.totalorder %s23, 1
      %s445 = scalar_select %p444, %s23, 1
      %p446 = scmp.lt.s32.totalorder %s443, 8
      %s447 = scalar_select %p446, %s443, 8
      %s448 = smul.addr %s447, 2
      %s449 = smul.addr %s445, 18
      %s450 = sadd.s32 %s448, %s449
      %s451 = smul.addr %s450, 8
      %s452 = scalar_lea.vmem %s1, %s451
      %p453 = pneg %p90
      %p454 = pneg %p87
      %s455 = smul.u32 8, %s24
      %s456 = ssub.s32 9, %s455
      %p457 = scmp.lt.s32.totalorder %s456, 8
      %s458 = scalar_select %p457, %s456, 8
      %s459 = smul.u32 128, %s458
      %p460 = scmp.lt.s32.totalorder %s23, 1
      %s461 = scalar_select %p460, %s23, 1
      %p462 = scmp.lt.s32.totalorder %s455, 8
      %s463 = scalar_select %p462, %s455, 8
      %s464 = smul.addr %s461, 9
      %s465 = sadd.s32 %s463, %s464
      %s466 = smul.addr %s465, 8
      %s467 = scalar_lea.vmem %s2, %s466
      %p468 = pneg %p118
      %p469 = pneg %p115
      %s470 = smul.u32 %s24, 8
      %s471 = sadd.s32 %s470, 8
      %p472 = scmp.lt.s32.totalorder %s471, 8
      %s473 = scalar_select %p472, %s471, 8
      %p474 = scmp.lt.s32.totalorder %s23, 1
      %s475 = scalar_select %p474, %s23, 1
      %p476 = scmp.lt.s32.totalorder %s473, 8
      %s477 = scalar_select %p476, %s473, 8
      %s478 = smul.addr %s475, 9
      %s479 = sadd.s32 %s477, %s478
      %s480 = smul.addr %s479, 8
      %s481 = scalar_lea.vmem %s3, %s480
      %p482 = pneg %p154
      %p483 = pneg %p151
      %s484 = smul.u32 8, %s24
      %p485 = scmp.lt.s32.totalorder %s23, 1
      %s486 = scalar_select %p485, %s23, 1
      %p487 = scmp.lt.s32.totalorder %s484, 7
      %s488 = scalar_select %p487, %s484, 7
      %s489 = smul.addr %s488, 2
      %s490 = smul.addr %s486, 16
      %s491 = sadd.s32 %s489, %s490
      %s492 = smul.addr %s491, 8
      %s493 = scalar_lea.vmem %s4, %s492
      %p494 = pneg %p182
      %p495 = pneg %p179
      %s496 = smul.u32 8, %s24
      %p497 = scmp.lt.s32.totalorder %s23, 1
      %s498 = scalar_select %p497, %s23, 1
      %p499 = scmp.lt.s32.totalorder %s496, 7
      %s500 = scalar_select %p499, %s496, 7
      %s501 = smul.addr %s498, 8
      %s502 = sadd.s32 %s500, %s501
      %s503 = smul.addr %s502, 8
      %s504 = scalar_lea.vmem %s5, %s503
      %p505 = pneg %p210
      %p506 = pneg %p207
      %p507 = pneg %p231
      %p508 = pneg %p228
      %p509 = pneg %p252
      %p510 = pneg %p249
      %p511 = pneg %p280
      %p512 = pneg %p277
      %s513 = smul.u32 8, %s24
      %p514 = scmp.lt.s32.totalorder %s23, 1
      %s515 = scalar_select %p514, %s23, 1
      %p516 = scmp.lt.s32.totalorder %s513, 7
      %s517 = scalar_select %p516, %s513, 7
      %s518 = smul.addr %s515, 8
      %s519 = sadd.s32 %s517, %s518
      %s520 = smul.addr %s519, 8
      %s521 = scalar_lea.vmem %s8, %s520
      %s522 = smul.u32 8, %s24
      %s523 = ssub.s32 9, %s522
      %p524 = scmp.lt.s32.totalorder %s523, 8
      %s525 = scalar_select %p524, %s523, 8
      %s526 = smul.u32 128, %s525
      %s527 = smul.u32 %s526, 2
      %p528 = scmp.lt.s32.totalorder %s23, 1
      %s529 = scalar_select %p528, %s23, 1
      %p530 = scmp.lt.s32.totalorder %s522, 8
      %s531 = scalar_select %p530, %s522, 8
      %s532 = smul.addr %s531, 2
      %s533 = smul.addr %s529, 18
      %s534 = sadd.s32 %s532, %s533
      %s535 = smul.addr %s534, 8
      %s536 = scalar_lea.vmem %s0, %s535
      %s537 = smul.u32 8, %s24
      %s538 = ssub.s32 9, %s537
      %p539 = scmp.lt.s32.totalorder %s538, 8
      %s540 = scalar_select %p539, %s538, 8
      %s541 = smul.u32 128, %s540
      %s542 = smul.u32 %s541, 2
      %s543 = smul.u32 %s24, 8
      %s544 = sadd.s32 %s543, 8
      %p545 = scmp.lt.s32.totalorder %s544, 8
      %s546 = scalar_select %p545, %s544, 8
      %p547 = scmp.lt.s32.totalorder %s23, 1
      %s548 = scalar_select %p547, %s23, 1
      %p549 = scmp.lt.s32.totalorder %s546, 8
      %s550 = scalar_select %p549, %s546, 8
      %s551 = smul.addr %s550, 2
      %s552 = smul.addr %s548, 18
      %s553 = sadd.s32 %s551, %s552
      %s554 = smul.addr %s553, 8
      %s555 = scalar_lea.vmem %s1, %s554
      %s556 = smul.u32 %s24, 8
      %s557 = sadd.s32 %s556, 8
      %p558 = scmp.lt.s32.totalorder %s557, 8
      %s559 = scalar_select %p558, %s557, 8
      %s560 = smul.u32 8, %s24
      %s561 = ssub.s32 9, %s560
      %p562 = scmp.lt.s32.totalorder %s561, 8
      %s563 = scalar_select %p562, %s561, 8
      %s564 = smul.u32 128, %s563
      %p565 = scmp.lt.s32.totalorder %s23, 1
      %s566 = scalar_select %p565, %s23, 1
      %p567 = scmp.lt.s32.totalorder %s560, 8
      %s568 = scalar_select %p567, %s560, 8
      %s569 = smul.addr %s566, 9
      %s570 = sadd.s32 %s568, %s569
      %s571 = smul.addr %s570, 8
      %s572 = scalar_lea.vmem %s2, %s571
      %s573 = smul.u32 8, %s24
      %s574 = ssub.s32 9, %s573
      %p575 = scmp.lt.s32.totalorder %s574, 8
      %s576 = scalar_select %p575, %s574, 8
      %s577 = smul.u32 128, %s576
      %s578 = smul.u32 %s24, 8
      %s579 = sadd.s32 %s578, 8
      %p580 = scmp.lt.s32.totalorder %s579, 8
      %s581 = scalar_select %p580, %s579, 8
      %p582 = scmp.lt.s32.totalorder %s23, 1
      %s583 = scalar_select %p582, %s23, 1
      %p584 = scmp.lt.s32.totalorder %s581, 8
      %s585 = scalar_select %p584, %s581, 8
      %s586 = smul.addr %s583, 9
      %s587 = sadd.s32 %s585, %s586
      %s588 = smul.addr %s587, 8
      %s589 = scalar_lea.vmem %s3, %s588
      %s590 = smul.u32 %s24, 8
      %s591 = sadd.s32 %s590, 8
      %p592 = scmp.lt.s32.totalorder %s591, 8
      %s593 = scalar_select %p592, %s591, 8
      %s594 = smul.u32 8, %s24
      %p595 = scmp.lt.s32.totalorder %s23, 1
      %s596 = scalar_select %p595, %s23, 1
      %p597 = scmp.lt.s32.totalorder %s594, 7
      %s598 = scalar_select %p597, %s594, 7
      %s599 = smul.addr %s598, 2
      %s600 = smul.addr %s596, 16
      %s601 = sadd.s32 %s599, %s600
      %s602 = smul.addr %s601, 8
      %s603 = scalar_lea.vmem %s4, %s602
      %s604 = smul.u32 8, %s24
      %s605 = smul.u32 8, %s24
      %p606 = scmp.lt.s32.totalorder %s23, 1
      %s607 = scalar_select %p606, %s23, 1
      %p608 = scmp.lt.s32.totalorder %s605, 7
      %s609 = scalar_select %p608, %s605, 7
      %s610 = smul.addr %s607, 8
      %s611 = sadd.s32 %s609, %s610
      %s612 = smul.addr %s611, 8
      %s613 = scalar_lea.vmem %s5, %s612
      %s614 = smul.u32 8, %s24
      %s615 = smul.u32 8, %s24
      %p616 = scmp.lt.s32.totalorder %s23, 1
      %s617 = scalar_select %p616, %s23, 1
      %p618 = scmp.lt.s32.totalorder %s615, 7
      %s619 = scalar_select %p618, %s615, 7
      %s620 = smul.addr %s617, 8
      %s621 = sadd.s32 %s619, %s620
      %s622 = smul.addr %s621, 8
      %s623 = scalar_lea.vmem %s8, %s622
      %s624 = smul.u32 8, %s24
      %v625 = vld [vmem:[%s536] sm:$0xff]
      %v626 = vld [vmem:[%s536 + $0x8] sm:$0x1]
      %v627 = vld [vmem:[%s536 + $0x10] sm:$0xff]
      %v628 = vld [vmem:[%s536 + $0x18] sm:$0x1]
      %v629 = vld [vmem:[%s536 + $0x20] sm:$0xff]
      %v630 = vld [vmem:[%s536 + $0x28] sm:$0x1]
      %v631 = vld [vmem:[%s536 + $0x30] sm:$0xff]
      %v632 = vld [vmem:[%s536 + $0x38] sm:$0x1]
      %v633 = vld [vmem:[%s536 + $0x40] sm:$0xff]
      %v634 = vld [vmem:[%s536 + $0x48] sm:$0x1]
      %v635 = vld [vmem:[%s536 + $0x50] sm:$0xff]
      %v636 = vld [vmem:[%s536 + $0x58] sm:$0x1]
      %v637 = vld [vmem:[%s536 + $0x60] sm:$0xff]
      %v638 = vld [vmem:[%s536 + $0x68] sm:$0x1]
      %v639 = vld [vmem:[%s536 + $0x70] sm:$0xff]
      %v640 = vld [vmem:[%s536 + $0x78] sm:$0x1]
      %v641 = vld [vmem:[%s572] sm:$0xff]
      %v642 = vld [vmem:[%s572 + $0x8] sm:$0xff]
      %v643 = vld [vmem:[%s572 + $0x10] sm:$0xff]
      %v644 = vld [vmem:[%s572 + $0x18] sm:$0xff]
      %v645 = vld [vmem:[%s572 + $0x20] sm:$0xff]
      %v646 = vld [vmem:[%s572 + $0x28] sm:$0xff]
      %v647 = vld [vmem:[%s572 + $0x30] sm:$0xff]
      %v648 = vld [vmem:[%s572 + $0x38] sm:$0xff]
      %v649 = vld [vmem:[%s603] sm:$0xff]
      %v650 = vld [vmem:[%s603 + $0x8] sm:$0x1]
      %v651 = vld [vmem:[%s603 + $0x10] sm:$0xff]
      %v652 = vld [vmem:[%s603 + $0x18] sm:$0x1]
      %v653 = vld [vmem:[%s603 + $0x20] sm:$0xff]
      %v654 = vld [vmem:[%s603 + $0x28] sm:$0x1]
      %v655 = vld [vmem:[%s603 + $0x30] sm:$0xff]
      %v656 = vld [vmem:[%s603 + $0x38] sm:$0x1]
      %v657 = vld [vmem:[%s603 + $0x40] sm:$0xff]
      %v658 = vld [vmem:[%s603 + $0x48] sm:$0x1]
      %v659 = vld [vmem:[%s603 + $0x50] sm:$0xff]
      %v660 = vld [vmem:[%s603 + $0x58] sm:$0x1]
      %v661 = vld [vmem:[%s603 + $0x60] sm:$0xff]
      %v662 = vld [vmem:[%s603 + $0x68] sm:$0x1]
      %v663 = vld [vmem:[%s603 + $0x70] sm:$0xff]
      %v664 = vld [vmem:[%s603 + $0x78] sm:$0x1]
      %v665 = vld [vmem:[%s613] sm:$0xff]
      %v666 = vld [vmem:[%s613 + $0x8] sm:$0xff]
      %v667 = vld [vmem:[%s613 + $0x10] sm:$0xff]
      %v668 = vld [vmem:[%s613 + $0x18] sm:$0xff]
      %v669 = vld [vmem:[%s613 + $0x20] sm:$0xff]
      %v670 = vld [vmem:[%s613 + $0x28] sm:$0xff]
      %v671 = vld [vmem:[%s613 + $0x30] sm:$0xff]
      %v672 = vld [vmem:[%s613 + $0x38] sm:$0xff]
      %v673 = vld [vmem:[%s7] sm:$0x1]
      %v675 = vlaneseq
      %v676 = vshrl.u32 %v675, 7
      %v677 = vsub.s32 0, %v676
      %v678 = vrot.slane %v673, %v677
      %v680 = vld [vmem:[%s6] sm:$0xf]
      %vm681 = vcmask 31744
      %v683 = vsel %vm681, %v625, 0
      %v686 = vsel %vm681, %v627, 0
      %v689 = vsel %vm681, %v629, 0
      %v692 = vsel %vm681, %v631, 0
      %v695 = vsel %vm681, %v633, 0
      %v698 = vsel %vm681, %v635, 0
      %v701 = vsel %vm681, %v637, 0
      %v704 = vsel %vm681, %v639, 0
      %vm706 = vcmask 1043456
      %v708 = vsel %vm706, %v680, 0
      %710 = vmatprep.subr.mxu0 0.0
      %711 = vmatpush1.msra.mxu0 0.0
      %712 = vmatprep.subr.mxu0 0.0
      %713 = vmatpush1.msra.mxu0 0.0
      %714 = vmatprep.subr.mxu0 0.0
      %715 = vmatpush1.msra.mxu0 0.0
      %716 = vmatprep.subr.mxu0 0.0
      %717 = vmatpush1.msra.mxu0 0.0
      %718 = vmatprep.subr.mxu0 0.0
      %719 = vmatpush1.msra.mxu0 0.0
      %720 = vmatprep.subr.mxu0 0.0
      %721 = vmatpush1.msra.mxu0 0.0
      %722 = vmatprep.subr.mxu0 0.0
      %723 = vmatpush1.msra.mxu0 0.0
      %724 = vmatprep.subr.mxu0 0.0
      %725 = vmatpush1.msra.mxu0 0.0
      %726 = vmatprep.subr.mxu0 0.0
      %727 = vmatpush1.msra.mxu0 0.0
      %728 = vmatprep.subr.mxu0 0.0
      %729 = vmatpush1.msra.mxu0 0.0
      %730 = vmatprep.subr.mxu0 0.0
      %731 = vmatpush1.msra.mxu0 0.0
      %732 = vmatprep.subr.mxu0 0.0
      %733 = vmatpush1.msra.mxu0 0.0
      %734 = vmatprep.subr.mxu0 0.0
      %735 = vmatpush1.msra.mxu0 0.0
      %736 = vmatprep.subr.mxu0 0.0
      %737 = vmatpush1.msra.mxu0 0.0
      %738 = vmatprep.subr.mxu0 0.0
      %739 = vmatpush1.msra.mxu0 0.0
      %740 = vmatprep.subr.mxu0 0.0
      %741 = vmatpush1.msra.mxu0 %v708
      %742 = vmatprep.subr.mxu0 0.0
      %743 = vmatpush2.msra.mxu0 0.0
      %744 = vmatprep.subr.mxu0 0.0
      %745 = vmatpush2.msra.mxu0 0.0
      %746 = vmatprep.subr.mxu0 0.0
      %747 = vmatpush2.msra.mxu0 0.0
      %748 = vmatprep.subr.mxu0 0.0
      %749 = vmatpush2.msra.mxu0 0.0
      %750 = vmatprep.subr.mxu0 0.0
      %751 = vmatpush2.msra.mxu0 0.0
      %752 = vmatprep.subr.mxu0 0.0
      %753 = vmatpush2.msra.mxu0 0.0
      %754 = vmatprep.subr.mxu0 0.0
      %755 = vmatpush2.msra.mxu0 0.0
      %756 = vmatprep.subr.mxu0 0.0
      %757 = vmatpush2.msra.mxu0 0.0
      %758 = vmatprep.subr.mxu0 0.0
      %759 = vmatpush2.msra.mxu0 0.0
      %760 = vmatprep.subr.mxu0 0.0
      %761 = vmatpush2.msra.mxu0 0.0
      %762 = vmatprep.subr.mxu0 0.0
      %763 = vmatpush2.msra.mxu0 0.0
      %764 = vmatprep.subr.mxu0 0.0
      %765 = vmatpush2.msra.mxu0 0.0
      %766 = vmatprep.subr.mxu0 0.0
      %767 = vmatpush2.msra.mxu0 0.0
      %768 = vmatprep.subr.mxu0 0.0
      %769 = vmatpush2.msra.mxu0 0.0
      %770 = vmatprep.subr.mxu0 0.0
      %771 = vmatpush2.msra.mxu0 0.0
      %772 = vmatprep.subr.mxu0 0.0
      %773 = vmatpush2.msra.mxu0 0.0
      %774 = vmatprep.mubr.f32.mxu0 0.0
      %775 = vmatmul.mubr.f32.gmra.mxu0 %v683
      %v776 = vpop.f32.mrf.mxu0
      %v777 = vadd.f32 0.0, %v776
      %v778 = vpop.f32.mrf.mxu0
      %779 = vmatprep.mubr.f32.mxu0 0.0
      %780 = vmatmul.mubr.f32.gmra.mxu0 %v686
      %v781 = vpop.f32.mrf.mxu0
      %v782 = vadd.f32 0.0, %v781
      %v783 = vpop.f32.mrf.mxu0
      %784 = vmatprep.mubr.f32.mxu0 0.0
      %785 = vmatmul.mubr.f32.gmra.mxu0 %v689
      %v786 = vpop.f32.mrf.mxu0
      %v787 = vadd.f32 0.0, %v786
      %v788 = vpop.f32.mrf.mxu0
      %789 = vmatprep.mubr.f32.mxu0 0.0
      %790 = vmatmul.mubr.f32.gmra.mxu0 %v692
      %v791 = vpop.f32.mrf.mxu0
      %v792 = vadd.f32 0.0, %v791
      %v793 = vpop.f32.mrf.mxu0
      %794 = vmatprep.mubr.f32.mxu0 0.0
      %795 = vmatmul.mubr.f32.gmra.mxu0 %v695
      %v796 = vpop.f32.mrf.mxu0
      %v797 = vadd.f32 0.0, %v796
      %v798 = vpop.f32.mrf.mxu0
      %799 = vmatprep.mubr.f32.mxu0 0.0
      %800 = vmatmul.mubr.f32.gmra.mxu0 %v698
      %v801 = vpop.f32.mrf.mxu0
      %v802 = vadd.f32 0.0, %v801
      %v803 = vpop.f32.mrf.mxu0
      %804 = vmatprep.mubr.f32.mxu0 0.0
      %805 = vmatmul.mubr.f32.gmra.mxu0 %v701
      %v806 = vpop.f32.mrf.mxu0
      %v807 = vadd.f32 0.0, %v806
      %v808 = vpop.f32.mrf.mxu0
      %809 = vmatprep.mubr.f32.mxu0 0.0
      %810 = vmatmul.mubr.f32.gmra.mxu0 %v704
      %v811 = vpop.f32.mrf.mxu0
      %v812 = vadd.f32 0.0, %v811
      %v813 = vpop.f32.mrf.mxu0
      %814 = vdwg.mxu0
      %v815 = vadd.f32 %v678, %v777
      %v816 = vadd.f32 %v678, %v782
      %v817 = vadd.f32 %v678, %v787
      %v818 = vadd.f32 %v678, %v792
      %v819 = vadd.f32 %v678, %v797
      %v820 = vadd.f32 %v678, %v802
      %v821 = vadd.f32 %v678, %v807
      %v822 = vadd.f32 %v678, %v812
      %s823 = scalar_lea.vmem %s6, 4
      %v824 = vld [vmem:[%s823] sm:$0xf]
      %v826 = vsel %vm681, %v641, 0
      %v829 = vsel %vm681, %v642, 0
      %v832 = vsel %vm681, %v643, 0
      %v835 = vsel %vm681, %v644, 0
      %v838 = vsel %vm681, %v645, 0
      %v841 = vsel %vm681, %v646, 0
      %v844 = vsel %vm681, %v647, 0
      %v847 = vsel %vm681, %v648, 0
      %v850 = vsel %vm706, %v824, 0
      %852 = vmatprep.subr.mxu0 0.0
      %853 = vmatpush1.msra.mxu0 0.0
      %854 = vmatprep.subr.mxu0 0.0
      %855 = vmatpush1.msra.mxu0 0.0
      %856 = vmatprep.subr.mxu0 0.0
      %857 = vmatpush1.msra.mxu0 0.0
      %858 = vmatprep.subr.mxu0 0.0
      %859 = vmatpush1.msra.mxu0 0.0
      %860 = vmatprep.subr.mxu0 0.0
      %861 = vmatpush1.msra.mxu0 0.0
      %862 = vmatprep.subr.mxu0 0.0
      %863 = vmatpush1.msra.mxu0 0.0
      %864 = vmatprep.subr.mxu0 0.0
      %865 = vmatpush1.msra.mxu0 0.0
      %866 = vmatprep.subr.mxu0 0.0
      %867 = vmatpush1.msra.mxu0 0.0
      %868 = vmatprep.subr.mxu0 0.0
      %869 = vmatpush1.msra.mxu0 0.0
      %870 = vmatprep.subr.mxu0 0.0
      %871 = vmatpush1.msra.mxu0 0.0
      %872 = vmatprep.subr.mxu0 0.0
      %873 = vmatpush1.msra.mxu0 0.0
      %874 = vmatprep.subr.mxu0 0.0
      %875 = vmatpush1.msra.mxu0 0.0
      %876 = vmatprep.subr.mxu0 0.0
      %877 = vmatpush1.msra.mxu0 0.0
      %878 = vmatprep.subr.mxu0 0.0
      %879 = vmatpush1.msra.mxu0 0.0
      %880 = vmatprep.subr.mxu0 0.0
      %881 = vmatpush1.msra.mxu0 0.0
      %882 = vmatprep.subr.mxu0 0.0
      %883 = vmatpush1.msra.mxu0 %v850
      %884 = vmatprep.subr.mxu0 0.0
      %885 = vmatpush2.msra.mxu0 0.0
      %886 = vmatprep.subr.mxu0 0.0
      %887 = vmatpush2.msra.mxu0 0.0
      %888 = vmatprep.subr.mxu0 0.0
      %889 = vmatpush2.msra.mxu0 0.0
      %890 = vmatprep.subr.mxu0 0.0
      %891 = vmatpush2.msra.mxu0 0.0
      %892 = vmatprep.subr.mxu0 0.0
      %893 = vmatpush2.msra.mxu0 0.0
      %894 = vmatprep.subr.mxu0 0.0
      %895 = vmatpush2.msra.mxu0 0.0
      %896 = vmatprep.subr.mxu0 0.0
      %897 = vmatpush2.msra.mxu0 0.0
      %898 = vmatprep.subr.mxu0 0.0
      %899 = vmatpush2.msra.mxu0 0.0
      %900 = vmatprep.subr.mxu0 0.0
      %901 = vmatpush2.msra.mxu0 0.0
      %902 = vmatprep.subr.mxu0 0.0
      %903 = vmatpush2.msra.mxu0 0.0
      %904 = vmatprep.subr.mxu0 0.0
      %905 = vmatpush2.msra.mxu0 0.0
      %906 = vmatprep.subr.mxu0 0.0
      %907 = vmatpush2.msra.mxu0 0.0
      %908 = vmatprep.subr.mxu0 0.0
      %909 = vmatpush2.msra.mxu0 0.0
      %910 = vmatprep.subr.mxu0 0.0
      %911 = vmatpush2.msra.mxu0 0.0
      %912 = vmatprep.subr.mxu0 0.0
      %913 = vmatpush2.msra.mxu0 0.0
      %914 = vmatprep.subr.mxu0 0.0
      %915 = vmatpush2.msra.mxu0 0.0
      %916 = vmatprep.mubr.f32.mxu0 0.0
      %917 = vmatmul.mubr.f32.gmra.mxu0 %v826
      %v918 = vpop.f32.mrf.mxu0
      %v919 = vadd.f32 0.0, %v918
      %v920 = vpop.f32.mrf.mxu0
      %921 = vmatprep.mubr.f32.mxu0 0.0
      %922 = vmatmul.mubr.f32.gmra.mxu0 %v829
      %v923 = vpop.f32.mrf.mxu0
      %v924 = vadd.f32 0.0, %v923
      %v925 = vpop.f32.mrf.mxu0
      %926 = vmatprep.mubr.f32.mxu0 0.0
      %927 = vmatmul.mubr.f32.gmra.mxu0 %v832
      %v928 = vpop.f32.mrf.mxu0
      %v929 = vadd.f32 0.0, %v928
      %v930 = vpop.f32.mrf.mxu0
      %931 = vmatprep.mubr.f32.mxu0 0.0
      %932 = vmatmul.mubr.f32.gmra.mxu0 %v835
      %v933 = vpop.f32.mrf.mxu0
      %v934 = vadd.f32 0.0, %v933
      %v935 = vpop.f32.mrf.mxu0
      %936 = vmatprep.mubr.f32.mxu0 0.0
      %937 = vmatmul.mubr.f32.gmra.mxu0 %v838
      %v938 = vpop.f32.mrf.mxu0
      %v939 = vadd.f32 0.0, %v938
      %v940 = vpop.f32.mrf.mxu0
      %941 = vmatprep.mubr.f32.mxu0 0.0
      %942 = vmatmul.mubr.f32.gmra.mxu0 %v841
      %v943 = vpop.f32.mrf.mxu0
      %v944 = vadd.f32 0.0, %v943
      %v945 = vpop.f32.mrf.mxu0
      %946 = vmatprep.mubr.f32.mxu0 0.0
      %947 = vmatmul.mubr.f32.gmra.mxu0 %v844
      %v948 = vpop.f32.mrf.mxu0
      %v949 = vadd.f32 0.0, %v948
      %v950 = vpop.f32.mrf.mxu0
      %951 = vmatprep.mubr.f32.mxu0 0.0
      %952 = vmatmul.mubr.f32.gmra.mxu0 %v847
      %v953 = vpop.f32.mrf.mxu0
      %v954 = vadd.f32 0.0, %v953
      %v955 = vpop.f32.mrf.mxu0
      %956 = vdwg.mxu0
      %v957 = vadd.f32 %v815, %v919
      %v958 = vadd.f32 %v816, %v924
      %v959 = vadd.f32 %v817, %v929
      %v960 = vadd.f32 %v818, %v934
      %v961 = vadd.f32 %v819, %v939
      %v962 = vadd.f32 %v820, %v944
      %v963 = vadd.f32 %v821, %v949
      %v964 = vadd.f32 %v822, %v954
      %vm973 = vcmask 1046528
      %v974 = vrot.slane %v625, 1
      %v975 = vrot.slane %v626, 1
      %v976 = vsel %vm973, %v974, %v975
      %v977 = vrot.slane %v627, 1
      %v978 = vrot.slane %v628, 1
      %v979 = vsel %vm973, %v977, %v978
      %v980 = vrot.slane %v629, 1
      %v981 = vrot.slane %v630, 1
      %v982 = vsel %vm973, %v980, %v981
      %v983 = vrot.slane %v631, 1
      %v984 = vrot.slane %v632, 1
      %v985 = vsel %vm973, %v983, %v984
      %v986 = vrot.slane %v633, 1
      %v987 = vrot.slane %v634, 1
      %v988 = vsel %vm973, %v986, %v987
      %v989 = vrot.slane %v635, 1
      %v990 = vrot.slane %v636, 1
      %v991 = vsel %vm973, %v989, %v990
      %v992 = vrot.slane %v637, 1
      %v993 = vrot.slane %v638, 1
      %v994 = vsel %vm973, %v992, %v993
      %v995 = vrot.slane %v639, 1
      %v996 = vrot.slane %v640, 1
      %v997 = vsel %vm973, %v995, %v996
      %s998 = scalar_lea.vmem %s6, 8
      %v999 = vld [vmem:[%s998] sm:$0xf]
      %v1000 = vsel %vm681, %v976, 0
      %v1002 = vsel %vm681, %v979, 0
      %v1004 = vsel %vm681, %v982, 0
      %v1006 = vsel %vm681, %v985, 0
      %v1008 = vsel %vm681, %v988, 0
      %v1010 = vsel %vm681, %v991, 0
      %v1012 = vsel %vm681, %v994, 0
      %v1014 = vsel %vm681, %v997, 0
      %v1017 = vsel %vm706, %v999, 0
      %1019 = vmatprep.subr.mxu0 0.0
      %1020 = vmatpush1.msra.mxu0 0.0
      %1021 = vmatprep.subr.mxu0 0.0
      %1022 = vmatpush1.msra.mxu0 0.0
      %1023 = vmatprep.subr.mxu0 0.0
      %1024 = vmatpush1.msra.mxu0 0.0
      %1025 = vmatprep.subr.mxu0 0.0
      %1026 = vmatpush1.msra.mxu0 0.0
      %1027 = vmatprep.subr.mxu0 0.0
      %1028 = vmatpush1.msra.mxu0 0.0
      %1029 = vmatprep.subr.mxu0 0.0
      %1030 = vmatpush1.msra.mxu0 0.0
      %1031 = vmatprep.subr.mxu0 0.0
      %1032 = vmatpush1.msra.mxu0 0.0
      %1033 = vmatprep.subr.mxu0 0.0
      %1034 = vmatpush1.msra.mxu0 0.0
      %1035 = vmatprep.subr.mxu0 0.0
      %1036 = vmatpush1.msra.mxu0 0.0
      %1037 = vmatprep.subr.mxu0 0.0
      %1038 = vmatpush1.msra.mxu0 0.0
      %1039 = vmatprep.subr.mxu0 0.0
      %1040 = vmatpush1.msra.mxu0 0.0
      %1041 = vmatprep.subr.mxu0 0.0
      %1042 = vmatpush1.msra.mxu0 0.0
      %1043 = vmatprep.subr.mxu0 0.0
      %1044 = vmatpush1.msra.mxu0 0.0
      %1045 = vmatprep.subr.mxu0 0.0
      %1046 = vmatpush1.msra.mxu0 0.0
      %1047 = vmatprep.subr.mxu0 0.0
      %1048 = vmatpush1.msra.mxu0 0.0
      %1049 = vmatprep.subr.mxu0 0.0
      %1050 = vmatpush1.msra.mxu0 %v1017
      %1051 = vmatprep.subr.mxu0 0.0
      %1052 = vmatpush2.msra.mxu0 0.0
      %1053 = vmatprep.subr.mxu0 0.0
      %1054 = vmatpush2.msra.mxu0 0.0
      %1055 = vmatprep.subr.mxu0 0.0
      %1056 = vmatpush2.msra.mxu0 0.0
      %1057 = vmatprep.subr.mxu0 0.0
      %1058 = vmatpush2.msra.mxu0 0.0
      %1059 = vmatprep.subr.mxu0 0.0
      %1060 = vmatpush2.msra.mxu0 0.0
      %1061 = vmatprep.subr.mxu0 0.0
      %1062 = vmatpush2.msra.mxu0 0.0
      %1063 = vmatprep.subr.mxu0 0.0
      %1064 = vmatpush2.msra.mxu0 0.0
      %1065 = vmatprep.subr.mxu0 0.0
      %1066 = vmatpush2.msra.mxu0 0.0
      %1067 = vmatprep.subr.mxu0 0.0
      %1068 = vmatpush2.msra.mxu0 0.0
      %1069 = vmatprep.subr.mxu0 0.0
      %1070 = vmatpush2.msra.mxu0 0.0
      %1071 = vmatprep.subr.mxu0 0.0
      %1072 = vmatpush2.msra.mxu0 0.0
      %1073 = vmatprep.subr.mxu0 0.0
      %1074 = vmatpush2.msra.mxu0 0.0
      %1075 = vmatprep.subr.mxu0 0.0
      %1076 = vmatpush2.msra.mxu0 0.0
      %1077 = vmatprep.subr.mxu0 0.0
      %1078 = vmatpush2.msra.mxu0 0.0
      %1079 = vmatprep.subr.mxu0 0.0
      %1080 = vmatpush2.msra.mxu0 0.0
      %1081 = vmatprep.subr.mxu0 0.0
      %1082 = vmatpush2.msra.mxu0 0.0
      %1083 = vmatprep.mubr.f32.mxu0 0.0
      %1084 = vmatmul.mubr.f32.gmra.mxu0 %v1000
      %v1085 = vpop.f32.mrf.mxu0
      %v1086 = vadd.f32 0.0, %v1085
      %v1087 = vpop.f32.mrf.mxu0
      %1088 = vmatprep.mubr.f32.mxu0 0.0
      %1089 = vmatmul.mubr.f32.gmra.mxu0 %v1002
      %v1090 = vpop.f32.mrf.mxu0
      %v1091 = vadd.f32 0.0, %v1090
      %v1092 = vpop.f32.mrf.mxu0
      %1093 = vmatprep.mubr.f32.mxu0 0.0
      %1094 = vmatmul.mubr.f32.gmra.mxu0 %v1004
      %v1095 = vpop.f32.mrf.mxu0
      %v1096 = vadd.f32 0.0, %v1095
      %v1097 = vpop.f32.mrf.mxu0
      %1098 = vmatprep.mubr.f32.mxu0 0.0
      %1099 = vmatmul.mubr.f32.gmra.mxu0 %v1006
      %v1100 = vpop.f32.mrf.mxu0
      %v1101 = vadd.f32 0.0, %v1100
      %v1102 = vpop.f32.mrf.mxu0
      %1103 = vmatprep.mubr.f32.mxu0 0.0
      %1104 = vmatmul.mubr.f32.gmra.mxu0 %v1008
      %v1105 = vpop.f32.mrf.mxu0
      %v1106 = vadd.f32 0.0, %v1105
      %v1107 = vpop.f32.mrf.mxu0
      %1108 = vmatprep.mubr.f32.mxu0 0.0
      %1109 = vmatmul.mubr.f32.gmra.mxu0 %v1010
      %v1110 = vpop.f32.mrf.mxu0
      %v1111 = vadd.f32 0.0, %v1110
      %v1112 = vpop.f32.mrf.mxu0
      %1113 = vmatprep.mubr.f32.mxu0 0.0
      %1114 = vmatmul.mubr.f32.gmra.mxu0 %v1012
      %v1115 = vpop.f32.mrf.mxu0
      %v1116 = vadd.f32 0.0, %v1115
      %v1117 = vpop.f32.mrf.mxu0
      %1118 = vmatprep.mubr.f32.mxu0 0.0
      %1119 = vmatmul.mubr.f32.gmra.mxu0 %v1014
      %v1120 = vpop.f32.mrf.mxu0
      %v1121 = vadd.f32 0.0, %v1120
      %v1122 = vpop.f32.mrf.mxu0
      %1123 = vdwg.mxu0
      %v1124 = vadd.f32 %v957, %v1086
      %v1125 = vadd.f32 %v958, %v1091
      %v1126 = vadd.f32 %v959, %v1096
      %v1127 = vadd.f32 %v960, %v1101
      %v1128 = vadd.f32 %v961, %v1106
      %v1129 = vadd.f32 %v962, %v1111
      %v1130 = vadd.f32 %v963, %v1116
      %v1131 = vadd.f32 %v964, %v1121
      %s1132 = scalar_lea.vmem %s6, 12
      %v1133 = vld [vmem:[%s1132] sm:$0xf]
      %v1135 = vsel %vm681, %v649, 0
      %v1138 = vsel %vm681, %v651, 0
      %v1141 = vsel %vm681, %v653, 0
      %v1144 = vsel %vm681, %v655, 0
      %v1147 = vsel %vm681, %v657, 0
      %v1150 = vsel %vm681, %v659, 0
      %v1153 = vsel %vm681, %v661, 0
      %v1156 = vsel %vm681, %v663, 0
      %v1159 = vsel %vm706, %v1133, 0
      %1161 = vmatprep.subr.mxu0 0.0
      %1162 = vmatpush1.msra.mxu0 0.0
      %1163 = vmatprep.subr.mxu0 0.0
      %1164 = vmatpush1.msra.mxu0 0.0
      %1165 = vmatprep.subr.mxu0 0.0
      %1166 = vmatpush1.msra.mxu0 0.0
      %1167 = vmatprep.subr.mxu0 0.0
      %1168 = vmatpush1.msra.mxu0 0.0
      %1169 = vmatprep.subr.mxu0 0.0
      %1170 = vmatpush1.msra.mxu0 0.0
      %1171 = vmatprep.subr.mxu0 0.0
      %1172 = vmatpush1.msra.mxu0 0.0
      %1173 = vmatprep.subr.mxu0 0.0
      %1174 = vmatpush1.msra.mxu0 0.0
      %1175 = vmatprep.subr.mxu0 0.0
      %1176 = vmatpush1.msra.mxu0 0.0
      %1177 = vmatprep.subr.mxu0 0.0
      %1178 = vmatpush1.msra.mxu0 0.0
      %1179 = vmatprep.subr.mxu0 0.0
      %1180 = vmatpush1.msra.mxu0 0.0
      %1181 = vmatprep.subr.mxu0 0.0
      %1182 = vmatpush1.msra.mxu0 0.0
      %1183 = vmatprep.subr.mxu0 0.0
      %1184 = vmatpush1.msra.mxu0 0.0
      %1185 = vmatprep.subr.mxu0 0.0
      %1186 = vmatpush1.msra.mxu0 0.0
      %1187 = vmatprep.subr.mxu0 0.0
      %1188 = vmatpush1.msra.mxu0 0.0
      %1189 = vmatprep.subr.mxu0 0.0
      %1190 = vmatpush1.msra.mxu0 0.0
      %1191 = vmatprep.subr.mxu0 0.0
      %1192 = vmatpush1.msra.mxu0 %v1159
      %1193 = vmatprep.subr.mxu0 0.0
      %1194 = vmatpush2.msra.mxu0 0.0
      %1195 = vmatprep.subr.mxu0 0.0
      %1196 = vmatpush2.msra.mxu0 0.0
      %1197 = vmatprep.subr.mxu0 0.0
      %1198 = vmatpush2.msra.mxu0 0.0
      %1199 = vmatprep.subr.mxu0 0.0
      %1200 = vmatpush2.msra.mxu0 0.0
      %1201 = vmatprep.subr.mxu0 0.0
      %1202 = vmatpush2.msra.mxu0 0.0
      %1203 = vmatprep.subr.mxu0 0.0
      %1204 = vmatpush2.msra.mxu0 0.0
      %1205 = vmatprep.subr.mxu0 0.0
      %1206 = vmatpush2.msra.mxu0 0.0
      %1207 = vmatprep.subr.mxu0 0.0
      %1208 = vmatpush2.msra.mxu0 0.0
      %1209 = vmatprep.subr.mxu0 0.0
      %1210 = vmatpush2.msra.mxu0 0.0
      %1211 = vmatprep.subr.mxu0 0.0
      %1212 = vmatpush2.msra.mxu0 0.0
      %1213 = vmatprep.subr.mxu0 0.0
      %1214 = vmatpush2.msra.mxu0 0.0
      %1215 = vmatprep.subr.mxu0 0.0
      %1216 = vmatpush2.msra.mxu0 0.0
      %1217 = vmatprep.subr.mxu0 0.0
      %1218 = vmatpush2.msra.mxu0 0.0
      %1219 = vmatprep.subr.mxu0 0.0
      %1220 = vmatpush2.msra.mxu0 0.0
      %1221 = vmatprep.subr.mxu0 0.0
      %1222 = vmatpush2.msra.mxu0 0.0
      %1223 = vmatprep.subr.mxu0 0.0
      %1224 = vmatpush2.msra.mxu0 0.0
      %1225 = vmatprep.mubr.f32.mxu0 0.0
      %1226 = vmatmul.mubr.f32.gmra.mxu0 %v1135
      %v1227 = vpop.f32.mrf.mxu0
      %v1228 = vadd.f32 0.0, %v1227
      %v1229 = vpop.f32.mrf.mxu0
      %1230 = vmatprep.mubr.f32.mxu0 0.0
      %1231 = vmatmul.mubr.f32.gmra.mxu0 %v1138
      %v1232 = vpop.f32.mrf.mxu0
      %v1233 = vadd.f32 0.0, %v1232
      %v1234 = vpop.f32.mrf.mxu0
      %1235 = vmatprep.mubr.f32.mxu0 0.0
      %1236 = vmatmul.mubr.f32.gmra.mxu0 %v1141
      %v1237 = vpop.f32.mrf.mxu0
      %v1238 = vadd.f32 0.0, %v1237
      %v1239 = vpop.f32.mrf.mxu0
      %1240 = vmatprep.mubr.f32.mxu0 0.0
      %1241 = vmatmul.mubr.f32.gmra.mxu0 %v1144
      %v1242 = vpop.f32.mrf.mxu0
      %v1243 = vadd.f32 0.0, %v1242
      %v1244 = vpop.f32.mrf.mxu0
      %1245 = vmatprep.mubr.f32.mxu0 0.0
      %1246 = vmatmul.mubr.f32.gmra.mxu0 %v1147
      %v1247 = vpop.f32.mrf.mxu0
      %v1248 = vadd.f32 0.0, %v1247
      %v1249 = vpop.f32.mrf.mxu0
      %1250 = vmatprep.mubr.f32.mxu0 0.0
      %1251 = vmatmul.mubr.f32.gmra.mxu0 %v1150
      %v1252 = vpop.f32.mrf.mxu0
      %v1253 = vadd.f32 0.0, %v1252
      %v1254 = vpop.f32.mrf.mxu0
      %1255 = vmatprep.mubr.f32.mxu0 0.0
      %1256 = vmatmul.mubr.f32.gmra.mxu0 %v1153
      %v1257 = vpop.f32.mrf.mxu0
      %v1258 = vadd.f32 0.0, %v1257
      %v1259 = vpop.f32.mrf.mxu0
      %1260 = vmatprep.mubr.f32.mxu0 0.0
      %1261 = vmatmul.mubr.f32.gmra.mxu0 %v1156
      %v1262 = vpop.f32.mrf.mxu0
      %v1263 = vadd.f32 0.0, %v1262
      %v1264 = vpop.f32.mrf.mxu0
      %1265 = vdwg.mxu0
      %v1266 = vadd.f32 %v1124, %v1228
      %v1267 = vadd.f32 %v1125, %v1233
      %v1268 = vadd.f32 %v1126, %v1238
      %v1269 = vadd.f32 %v1127, %v1243
      %v1270 = vadd.f32 %v1128, %v1248
      %v1271 = vadd.f32 %v1129, %v1253
      %v1272 = vadd.f32 %v1130, %v1258
      %v1273 = vadd.f32 %v1131, %v1263
      %s1274 = scalar_lea.vmem %s6, 16
      %v1275 = vld [vmem:[%s1274] sm:$0xf]
      %v1277 = vsel %vm681, %v665, 0
      %v1280 = vsel %vm681, %v666, 0
      %v1283 = vsel %vm681, %v667, 0
      %v1286 = vsel %vm681, %v668, 0
      %v1289 = vsel %vm681, %v669, 0
      %v1292 = vsel %vm681, %v670, 0
      %v1295 = vsel %vm681, %v671, 0
      %v1298 = vsel %vm681, %v672, 0
      %v1301 = vsel %vm706, %v1275, 0
      %1303 = vmatprep.subr.mxu0 0.0
      %1304 = vmatpush1.msra.mxu0 0.0
      %1305 = vmatprep.subr.mxu0 0.0
      %1306 = vmatpush1.msra.mxu0 0.0
      %1307 = vmatprep.subr.mxu0 0.0
      %1308 = vmatpush1.msra.mxu0 0.0
      %1309 = vmatprep.subr.mxu0 0.0
      %1310 = vmatpush1.msra.mxu0 0.0
      %1311 = vmatprep.subr.mxu0 0.0
      %1312 = vmatpush1.msra.mxu0 0.0
      %1313 = vmatprep.subr.mxu0 0.0
      %1314 = vmatpush1.msra.mxu0 0.0
      %1315 = vmatprep.subr.mxu0 0.0
      %1316 = vmatpush1.msra.mxu0 0.0
      %1317 = vmatprep.subr.mxu0 0.0
      %1318 = vmatpush1.msra.mxu0 0.0
      %1319 = vmatprep.subr.mxu0 0.0
      %1320 = vmatpush1.msra.mxu0 0.0
      %1321 = vmatprep.subr.mxu0 0.0
      %1322 = vmatpush1.msra.mxu0 0.0
      %1323 = vmatprep.subr.mxu0 0.0
      %1324 = vmatpush1.msra.mxu0 0.0
      %1325 = vmatprep.subr.mxu0 0.0
      %1326 = vmatpush1.msra.mxu0 0.0
      %1327 = vmatprep.subr.mxu0 0.0
      %1328 = vmatpush1.msra.mxu0 0.0
      %1329 = vmatprep.subr.mxu0 0.0
      %1330 = vmatpush1.msra.mxu0 0.0
      %1331 = vmatprep.subr.mxu0 0.0
      %1332 = vmatpush1.msra.mxu0 0.0
      %1333 = vmatprep.subr.mxu0 0.0
      %1334 = vmatpush1.msra.mxu0 %v1301
      %1335 = vmatprep.subr.mxu0 0.0
      %1336 = vmatpush2.msra.mxu0 0.0
      %1337 = vmatprep.subr.mxu0 0.0
      %1338 = vmatpush2.msra.mxu0 0.0
      %1339 = vmatprep.subr.mxu0 0.0
      %1340 = vmatpush2.msra.mxu0 0.0
      %1341 = vmatprep.subr.mxu0 0.0
      %1342 = vmatpush2.msra.mxu0 0.0
      %1343 = vmatprep.subr.mxu0 0.0
      %1344 = vmatpush2.msra.mxu0 0.0
      %1345 = vmatprep.subr.mxu0 0.0
      %1346 = vmatpush2.msra.mxu0 0.0
      %1347 = vmatprep.subr.mxu0 0.0
      %1348 = vmatpush2.msra.mxu0 0.0
      %1349 = vmatprep.subr.mxu0 0.0
      %1350 = vmatpush2.msra.mxu0 0.0
      %1351 = vmatprep.subr.mxu0 0.0
      %1352 = vmatpush2.msra.mxu0 0.0
      %1353 = vmatprep.subr.mxu0 0.0
      %1354 = vmatpush2.msra.mxu0 0.0
      %1355 = vmatprep.subr.mxu0 0.0
      %1356 = vmatpush2.msra.mxu0 0.0
      %1357 = vmatprep.subr.mxu0 0.0
      %1358 = vmatpush2.msra.mxu0 0.0
      %1359 = vmatprep.subr.mxu0 0.0
      %1360 = vmatpush2.msra.mxu0 0.0
      %1361 = vmatprep.subr.mxu0 0.0
      %1362 = vmatpush2.msra.mxu0 0.0
      %1363 = vmatprep.subr.mxu0 0.0
      %1364 = vmatpush2.msra.mxu0 0.0
      %1365 = vmatprep.subr.mxu0 0.0
      %1366 = vmatpush2.msra.mxu0 0.0
      %1367 = vmatprep.mubr.f32.mxu0 0.0
      %1368 = vmatmul.mubr.f32.gmra.mxu0 %v1277
      %v1369 = vpop.f32.mrf.mxu0
      %v1370 = vadd.f32 0.0, %v1369
      %v1371 = vpop.f32.mrf.mxu0
      %1372 = vmatprep.mubr.f32.mxu0 0.0
      %1373 = vmatmul.mubr.f32.gmra.mxu0 %v1280
      %v1374 = vpop.f32.mrf.mxu0
      %v1375 = vadd.f32 0.0, %v1374
      %v1376 = vpop.f32.mrf.mxu0
      %1377 = vmatprep.mubr.f32.mxu0 0.0
      %1378 = vmatmul.mubr.f32.gmra.mxu0 %v1283
      %v1379 = vpop.f32.mrf.mxu0
      %v1380 = vadd.f32 0.0, %v1379
      %v1381 = vpop.f32.mrf.mxu0
      %1382 = vmatprep.mubr.f32.mxu0 0.0
      %1383 = vmatmul.mubr.f32.gmra.mxu0 %v1286
      %v1384 = vpop.f32.mrf.mxu0
      %v1385 = vadd.f32 0.0, %v1384
      %v1386 = vpop.f32.mrf.mxu0
      %1387 = vmatprep.mubr.f32.mxu0 0.0
      %1388 = vmatmul.mubr.f32.gmra.mxu0 %v1289
      %v1389 = vpop.f32.mrf.mxu0
      %v1390 = vadd.f32 0.0, %v1389
      %v1391 = vpop.f32.mrf.mxu0
      %1392 = vmatprep.mubr.f32.mxu0 0.0
      %1393 = vmatmul.mubr.f32.gmra.mxu0 %v1292
      %v1394 = vpop.f32.mrf.mxu0
      %v1395 = vadd.f32 0.0, %v1394
      %v1396 = vpop.f32.mrf.mxu0
      %1397 = vmatprep.mubr.f32.mxu0 0.0
      %1398 = vmatmul.mubr.f32.gmra.mxu0 %v1295
      %v1399 = vpop.f32.mrf.mxu0
      %v1400 = vadd.f32 0.0, %v1399
      %v1401 = vpop.f32.mrf.mxu0
      %1402 = vmatprep.mubr.f32.mxu0 0.0
      %1403 = vmatmul.mubr.f32.gmra.mxu0 %v1298
      %v1404 = vpop.f32.mrf.mxu0
      %v1405 = vadd.f32 0.0, %v1404
      %v1406 = vpop.f32.mrf.mxu0
      %1407 = vdwg.mxu0
      %v1408 = vadd.f32 %v1266, %v1370
      %v1409 = vadd.f32 %v1267, %v1375
      %v1410 = vadd.f32 %v1268, %v1380
      %v1411 = vadd.f32 %v1269, %v1385
      %v1412 = vadd.f32 %v1270, %v1390
      %v1413 = vadd.f32 %v1271, %v1395
      %v1414 = vadd.f32 %v1272, %v1400
      %v1415 = vadd.f32 %v1273, %v1405
      %v1424 = vrot.slane %v649, 1
      %v1425 = vrot.slane %v650, 1
      %v1426 = vsel %vm973, %v1424, %v1425
      %v1427 = vrot.slane %v651, 1
      %v1428 = vrot.slane %v652, 1
      %v1429 = vsel %vm973, %v1427, %v1428
      %v1430 = vrot.slane %v653, 1
      %v1431 = vrot.slane %v654, 1
      %v1432 = vsel %vm973, %v1430, %v1431
      %v1433 = vrot.slane %v655, 1
      %v1434 = vrot.slane %v656, 1
      %v1435 = vsel %vm973, %v1433, %v1434
      %v1436 = vrot.slane %v657, 1
      %v1437 = vrot.slane %v658, 1
      %v1438 = vsel %vm973, %v1436, %v1437
      %v1439 = vrot.slane %v659, 1
      %v1440 = vrot.slane %v660, 1
      %v1441 = vsel %vm973, %v1439, %v1440
      %v1442 = vrot.slane %v661, 1
      %v1443 = vrot.slane %v662, 1
      %v1444 = vsel %vm973, %v1442, %v1443
      %v1445 = vrot.slane %v663, 1
      %v1446 = vrot.slane %v664, 1
      %v1447 = vsel %vm973, %v1445, %v1446
      %s1448 = scalar_lea.vmem %s6, 20
      %v1449 = vld [vmem:[%s1448] sm:$0xf]
      %v1450 = vsel %vm681, %v1426, 0
      %v1452 = vsel %vm681, %v1429, 0
      %v1454 = vsel %vm681, %v1432, 0
      %v1456 = vsel %vm681, %v1435, 0
      %v1458 = vsel %vm681, %v1438, 0
      %v1460 = vsel %vm681, %v1441, 0
      %v1462 = vsel %vm681, %v1444, 0
      %v1464 = vsel %vm681, %v1447, 0
      %v1467 = vsel %vm706, %v1449, 0
      %1469 = vmatprep.subr.mxu0 0.0
      %1470 = vmatpush1.msra.mxu0 0.0
      %1471 = vmatprep.subr.mxu0 0.0
      %1472 = vmatpush1.msra.mxu0 0.0
      %1473 = vmatprep.subr.mxu0 0.0
      %1474 = vmatpush1.msra.mxu0 0.0
      %1475 = vmatprep.subr.mxu0 0.0
      %1476 = vmatpush1.msra.mxu0 0.0
      %1477 = vmatprep.subr.mxu0 0.0
      %1478 = vmatpush1.msra.mxu0 0.0
      %1479 = vmatprep.subr.mxu0 0.0
      %1480 = vmatpush1.msra.mxu0 0.0
      %1481 = vmatprep.subr.mxu0 0.0
      %1482 = vmatpush1.msra.mxu0 0.0
      %1483 = vmatprep.subr.mxu0 0.0
      %1484 = vmatpush1.msra.mxu0 0.0
      %1485 = vmatprep.subr.mxu0 0.0
      %1486 = vmatpush1.msra.mxu0 0.0
      %1487 = vmatprep.subr.mxu0 0.0
      %1488 = vmatpush1.msra.mxu0 0.0
      %1489 = vmatprep.subr.mxu0 0.0
      %1490 = vmatpush1.msra.mxu0 0.0
      %1491 = vmatprep.subr.mxu0 0.0
      %1492 = vmatpush1.msra.mxu0 0.0
      %1493 = vmatprep.subr.mxu0 0.0
      %1494 = vmatpush1.msra.mxu0 0.0
      %1495 = vmatprep.subr.mxu0 0.0
      %1496 = vmatpush1.msra.mxu0 0.0
      %1497 = vmatprep.subr.mxu0 0.0
      %1498 = vmatpush1.msra.mxu0 0.0
      %1499 = vmatprep.subr.mxu0 0.0
      %1500 = vmatpush1.msra.mxu0 %v1467
      %1501 = vmatprep.subr.mxu0 0.0
      %1502 = vmatpush2.msra.mxu0 0.0
      %1503 = vmatprep.subr.mxu0 0.0
      %1504 = vmatpush2.msra.mxu0 0.0
      %1505 = vmatprep.subr.mxu0 0.0
      %1506 = vmatpush2.msra.mxu0 0.0
      %1507 = vmatprep.subr.mxu0 0.0
      %1508 = vmatpush2.msra.mxu0 0.0
      %1509 = vmatprep.subr.mxu0 0.0
      %1510 = vmatpush2.msra.mxu0 0.0
      %1511 = vmatprep.subr.mxu0 0.0
      %1512 = vmatpush2.msra.mxu0 0.0
      %1513 = vmatprep.subr.mxu0 0.0
      %1514 = vmatpush2.msra.mxu0 0.0
      %1515 = vmatprep.subr.mxu0 0.0
      %1516 = vmatpush2.msra.mxu0 0.0
      %1517 = vmatprep.subr.mxu0 0.0
      %1518 = vmatpush2.msra.mxu0 0.0
      %1519 = vmatprep.subr.mxu0 0.0
      %1520 = vmatpush2.msra.mxu0 0.0
      %1521 = vmatprep.subr.mxu0 0.0
      %1522 = vmatpush2.msra.mxu0 0.0
      %1523 = vmatprep.subr.mxu0 0.0
      %1524 = vmatpush2.msra.mxu0 0.0
      %1525 = vmatprep.subr.mxu0 0.0
      %1526 = vmatpush2.msra.mxu0 0.0
      %1527 = vmatprep.subr.mxu0 0.0
      %1528 = vmatpush2.msra.mxu0 0.0
      %1529 = vmatprep.subr.mxu0 0.0
      %1530 = vmatpush2.msra.mxu0 0.0
      %1531 = vmatprep.subr.mxu0 0.0
      %1532 = vmatpush2.msra.mxu0 0.0
      %1533 = vmatprep.mubr.f32.mxu0 0.0
      %1534 = vmatmul.mubr.f32.gmra.mxu0 %v1450
      %v1535 = vpop.f32.mrf.mxu0
      %v1536 = vadd.f32 0.0, %v1535
      %v1537 = vpop.f32.mrf.mxu0
      %1538 = vmatprep.mubr.f32.mxu0 0.0
      %1539 = vmatmul.mubr.f32.gmra.mxu0 %v1452
      %v1540 = vpop.f32.mrf.mxu0
      %v1541 = vadd.f32 0.0, %v1540
      %v1542 = vpop.f32.mrf.mxu0
      %1543 = vmatprep.mubr.f32.mxu0 0.0
      %1544 = vmatmul.mubr.f32.gmra.mxu0 %v1454
      %v1545 = vpop.f32.mrf.mxu0
      %v1546 = vadd.f32 0.0, %v1545
      %v1547 = vpop.f32.mrf.mxu0
      %1548 = vmatprep.mubr.f32.mxu0 0.0
      %1549 = vmatmul.mubr.f32.gmra.mxu0 %v1456
      %v1550 = vpop.f32.mrf.mxu0
      %v1551 = vadd.f32 0.0, %v1550
      %v1552 = vpop.f32.mrf.mxu0
      %1553 = vmatprep.mubr.f32.mxu0 0.0
      %1554 = vmatmul.mubr.f32.gmra.mxu0 %v1458
      %v1555 = vpop.f32.mrf.mxu0
      %v1556 = vadd.f32 0.0, %v1555
      %v1557 = vpop.f32.mrf.mxu0
      %1558 = vmatprep.mubr.f32.mxu0 0.0
      %1559 = vmatmul.mubr.f32.gmra.mxu0 %v1460
      %v1560 = vpop.f32.mrf.mxu0
      %v1561 = vadd.f32 0.0, %v1560
      %v1562 = vpop.f32.mrf.mxu0
      %1563 = vmatprep.mubr.f32.mxu0 0.0
      %1564 = vmatmul.mubr.f32.gmra.mxu0 %v1462
      %v1565 = vpop.f32.mrf.mxu0
      %v1566 = vadd.f32 0.0, %v1565
      %v1567 = vpop.f32.mrf.mxu0
      %1568 = vmatprep.mubr.f32.mxu0 0.0
      %1569 = vmatmul.mubr.f32.gmra.mxu0 %v1464
      %v1570 = vpop.f32.mrf.mxu0
      %v1571 = vadd.f32 0.0, %v1570
      %v1572 = vpop.f32.mrf.mxu0
      %1573 = vdwg.mxu0
      %v1574 = vadd.f32 %v1408, %v1536
      %v1575 = vadd.f32 %v1409, %v1541
      %v1576 = vadd.f32 %v1410, %v1546
      %v1577 = vadd.f32 %v1411, %v1551
      %v1578 = vadd.f32 %v1412, %v1556
      %v1579 = vadd.f32 %v1413, %v1561
      %v1580 = vadd.f32 %v1414, %v1566
      %v1581 = vadd.f32 %v1415, %v1571
      %v1582 = vld [vmem:[%s555] sm:$0xff]
      %v1583 = vld [vmem:[%s555 + $0x8] sm:$0x1]
      %v1584 = vld [vmem:[%s589] sm:$0xff]
      %s1585 = scalar_lea.vmem %s6, 24
      %v1586 = vld [vmem:[%s1585] sm:$0xf]
      %s1587 = scalar_lea.vmem %s6, 28
      %v1588 = vld [vmem:[%s1587] sm:$0xf]
      %v1590 = vsel %vm681, %v1584, 0
      %v1593 = vsel %vm706, %v1588, 0
      %1595 = vmatprep.subr.mxu0 0.0
      %1596 = vmatpush1.msra.mxu0 0.0
      %1597 = vmatprep.subr.mxu0 0.0
      %1598 = vmatpush1.msra.mxu0 0.0
      %1599 = vmatprep.subr.mxu0 0.0
      %1600 = vmatpush1.msra.mxu0 0.0
      %1601 = vmatprep.subr.mxu0 0.0
      %1602 = vmatpush1.msra.mxu0 0.0
      %1603 = vmatprep.subr.mxu0 0.0
      %1604 = vmatpush1.msra.mxu0 0.0
      %1605 = vmatprep.subr.mxu0 0.0
      %1606 = vmatpush1.msra.mxu0 0.0
      %1607 = vmatprep.subr.mxu0 0.0
      %1608 = vmatpush1.msra.mxu0 0.0
      %1609 = vmatprep.subr.mxu0 0.0
      %1610 = vmatpush1.msra.mxu0 0.0
      %1611 = vmatprep.subr.mxu0 0.0
      %1612 = vmatpush1.msra.mxu0 0.0
      %1613 = vmatprep.subr.mxu0 0.0
      %1614 = vmatpush1.msra.mxu0 0.0
      %1615 = vmatprep.subr.mxu0 0.0
      %1616 = vmatpush1.msra.mxu0 0.0
      %1617 = vmatprep.subr.mxu0 0.0
      %1618 = vmatpush1.msra.mxu0 0.0
      %1619 = vmatprep.subr.mxu0 0.0
      %1620 = vmatpush1.msra.mxu0 0.0
      %1621 = vmatprep.subr.mxu0 0.0
      %1622 = vmatpush1.msra.mxu0 0.0
      %1623 = vmatprep.subr.mxu0 0.0
      %1624 = vmatpush1.msra.mxu0 0.0
      %1625 = vmatprep.subr.mxu0 0.0
      %1626 = vmatpush1.msra.mxu0 %v1593
      %1627 = vmatprep.subr.mxu0 0.0
      %1628 = vmatpush2.msra.mxu0 0.0
      %1629 = vmatprep.subr.mxu0 0.0
      %1630 = vmatpush2.msra.mxu0 0.0
      %1631 = vmatprep.subr.mxu0 0.0
      %1632 = vmatpush2.msra.mxu0 0.0
      %1633 = vmatprep.subr.mxu0 0.0
      %1634 = vmatpush2.msra.mxu0 0.0
      %1635 = vmatprep.subr.mxu0 0.0
      %1636 = vmatpush2.msra.mxu0 0.0
      %1637 = vmatprep.subr.mxu0 0.0
      %1638 = vmatpush2.msra.mxu0 0.0
      %1639 = vmatprep.subr.mxu0 0.0
      %1640 = vmatpush2.msra.mxu0 0.0
      %1641 = vmatprep.subr.mxu0 0.0
      %1642 = vmatpush2.msra.mxu0 0.0
      %1643 = vmatprep.subr.mxu0 0.0
      %1644 = vmatpush2.msra.mxu0 0.0
      %1645 = vmatprep.subr.mxu0 0.0
      %1646 = vmatpush2.msra.mxu0 0.0
      %1647 = vmatprep.subr.mxu0 0.0
      %1648 = vmatpush2.msra.mxu0 0.0
      %1649 = vmatprep.subr.mxu0 0.0
      %1650 = vmatpush2.msra.mxu0 0.0
      %1651 = vmatprep.subr.mxu0 0.0
      %1652 = vmatpush2.msra.mxu0 0.0
      %1653 = vmatprep.subr.mxu0 0.0
      %1654 = vmatpush2.msra.mxu0 0.0
      %1655 = vmatprep.subr.mxu0 0.0
      %1656 = vmatpush2.msra.mxu0 0.0
      %1657 = vmatprep.subr.mxu0 0.0
      %1658 = vmatpush2.msra.mxu0 0.0
      %1659 = vmatprep.mubr.f32.mxu0 0.0
      %1660 = vmatmul.mubr.f32.gmra.mxu0 %v1590
      %v1661 = vpop.f32.mrf.mxu0
      %v1662 = vadd.f32 0.0, %v1661
      %v1663 = vpop.f32.mrf.mxu0
      %1664 = vdwg.mxu0
      %v1666 = vsel %vm681, %v1582, 0
      %v1669 = vsel %vm706, %v1586, 0
      %1671 = vmatprep.subr.mxu0 0.0
      %1672 = vmatpush1.msra.mxu0 0.0
      %1673 = vmatprep.subr.mxu0 0.0
      %1674 = vmatpush1.msra.mxu0 0.0
      %1675 = vmatprep.subr.mxu0 0.0
      %1676 = vmatpush1.msra.mxu0 0.0
      %1677 = vmatprep.subr.mxu0 0.0
      %1678 = vmatpush1.msra.mxu0 0.0
      %1679 = vmatprep.subr.mxu0 0.0
      %1680 = vmatpush1.msra.mxu0 0.0
      %1681 = vmatprep.subr.mxu0 0.0
      %1682 = vmatpush1.msra.mxu0 0.0
      %1683 = vmatprep.subr.mxu0 0.0
      %1684 = vmatpush1.msra.mxu0 0.0
      %1685 = vmatprep.subr.mxu0 0.0
      %1686 = vmatpush1.msra.mxu0 0.0
      %1687 = vmatprep.subr.mxu0 0.0
      %1688 = vmatpush1.msra.mxu0 0.0
      %1689 = vmatprep.subr.mxu0 0.0
      %1690 = vmatpush1.msra.mxu0 0.0
      %1691 = vmatprep.subr.mxu0 0.0
      %1692 = vmatpush1.msra.mxu0 0.0
      %1693 = vmatprep.subr.mxu0 0.0
      %1694 = vmatpush1.msra.mxu0 0.0
      %1695 = vmatprep.subr.mxu0 0.0
      %1696 = vmatpush1.msra.mxu0 0.0
      %1697 = vmatprep.subr.mxu0 0.0
      %1698 = vmatpush1.msra.mxu0 0.0
      %1699 = vmatprep.subr.mxu0 0.0
      %1700 = vmatpush1.msra.mxu0 0.0
      %1701 = vmatprep.subr.mxu0 0.0
      %1702 = vmatpush1.msra.mxu0 %v1669
      %1703 = vmatprep.subr.mxu0 0.0
      %1704 = vmatpush2.msra.mxu0 0.0
      %1705 = vmatprep.subr.mxu0 0.0
      %1706 = vmatpush2.msra.mxu0 0.0
      %1707 = vmatprep.subr.mxu0 0.0
      %1708 = vmatpush2.msra.mxu0 0.0
      %1709 = vmatprep.subr.mxu0 0.0
      %1710 = vmatpush2.msra.mxu0 0.0
      %1711 = vmatprep.subr.mxu0 0.0
      %1712 = vmatpush2.msra.mxu0 0.0
      %1713 = vmatprep.subr.mxu0 0.0
      %1714 = vmatpush2.msra.mxu0 0.0
      %1715 = vmatprep.subr.mxu0 0.0
      %1716 = vmatpush2.msra.mxu0 0.0
      %1717 = vmatprep.subr.mxu0 0.0
      %1718 = vmatpush2.msra.mxu0 0.0
      %1719 = vmatprep.subr.mxu0 0.0
      %1720 = vmatpush2.msra.mxu0 0.0
      %1721 = vmatprep.subr.mxu0 0.0
      %1722 = vmatpush2.msra.mxu0 0.0
      %1723 = vmatprep.subr.mxu0 0.0
      %1724 = vmatpush2.msra.mxu0 0.0
      %1725 = vmatprep.subr.mxu0 0.0
      %1726 = vmatpush2.msra.mxu0 0.0
      %1727 = vmatprep.subr.mxu0 0.0
      %1728 = vmatpush2.msra.mxu0 0.0
      %1729 = vmatprep.subr.mxu0 0.0
      %1730 = vmatpush2.msra.mxu0 0.0
      %1731 = vmatprep.subr.mxu0 0.0
      %1732 = vmatpush2.msra.mxu0 0.0
      %1733 = vmatprep.subr.mxu0 0.0
      %1734 = vmatpush2.msra.mxu0 0.0
      %1735 = vmatprep.mubr.f32.mxu0 0.0
      %1736 = vmatmul.mubr.f32.gmra.mxu0 %v1666
      %v1737 = vpop.f32.mrf.mxu0
      %v1738 = vadd.f32 %v1662, %v1737
      %v1739 = vpop.f32.mrf.mxu0
      %1740 = vdwg.mxu0
      %s1741 = scalar_lea.vmem %s6, 32
      %v1742 = vld [vmem:[%s1741] sm:$0xf]
      %v1744 = vrot.slane %v1582, 1
      %v1745 = vrot.slane %v1583, 1
      %v1746 = vsel %vm973, %v1744, %v1745
      %v1747 = vsel %vm681, %v1746, 0
      %v1750 = vsel %vm706, %v1742, 0
      %1752 = vmatprep.subr.mxu0 0.0
      %1753 = vmatpush1.msra.mxu0 0.0
      %1754 = vmatprep.subr.mxu0 0.0
      %1755 = vmatpush1.msra.mxu0 0.0
      %1756 = vmatprep.subr.mxu0 0.0
      %1757 = vmatpush1.msra.mxu0 0.0
      %1758 = vmatprep.subr.mxu0 0.0
      %1759 = vmatpush1.msra.mxu0 0.0
      %1760 = vmatprep.subr.mxu0 0.0
      %1761 = vmatpush1.msra.mxu0 0.0
      %1762 = vmatprep.subr.mxu0 0.0
      %1763 = vmatpush1.msra.mxu0 0.0
      %1764 = vmatprep.subr.mxu0 0.0
      %1765 = vmatpush1.msra.mxu0 0.0
      %1766 = vmatprep.subr.mxu0 0.0
      %1767 = vmatpush1.msra.mxu0 0.0
      %1768 = vmatprep.subr.mxu0 0.0
      %1769 = vmatpush1.msra.mxu0 0.0
      %1770 = vmatprep.subr.mxu0 0.0
      %1771 = vmatpush1.msra.mxu0 0.0
      %1772 = vmatprep.subr.mxu0 0.0
      %1773 = vmatpush1.msra.mxu0 0.0
      %1774 = vmatprep.subr.mxu0 0.0
      %1775 = vmatpush1.msra.mxu0 0.0
      %1776 = vmatprep.subr.mxu0 0.0
      %1777 = vmatpush1.msra.mxu0 0.0
      %1778 = vmatprep.subr.mxu0 0.0
      %1779 = vmatpush1.msra.mxu0 0.0
      %1780 = vmatprep.subr.mxu0 0.0
      %1781 = vmatpush1.msra.mxu0 0.0
      %1782 = vmatprep.subr.mxu0 0.0
      %1783 = vmatpush1.msra.mxu0 %v1750
      %1784 = vmatprep.subr.mxu0 0.0
      %1785 = vmatpush2.msra.mxu0 0.0
      %1786 = vmatprep.subr.mxu0 0.0
      %1787 = vmatpush2.msra.mxu0 0.0
      %1788 = vmatprep.subr.mxu0 0.0
      %1789 = vmatpush2.msra.mxu0 0.0
      %1790 = vmatprep.subr.mxu0 0.0
      %1791 = vmatpush2.msra.mxu0 0.0
      %1792 = vmatprep.subr.mxu0 0.0
      %1793 = vmatpush2.msra.mxu0 0.0
      %1794 = vmatprep.subr.mxu0 0.0
      %1795 = vmatpush2.msra.mxu0 0.0
      %1796 = vmatprep.subr.mxu0 0.0
      %1797 = vmatpush2.msra.mxu0 0.0
      %1798 = vmatprep.subr.mxu0 0.0
      %1799 = vmatpush2.msra.mxu0 0.0
      %1800 = vmatprep.subr.mxu0 0.0
      %1801 = vmatpush2.msra.mxu0 0.0
      %1802 = vmatprep.subr.mxu0 0.0
      %1803 = vmatpush2.msra.mxu0 0.0
      %1804 = vmatprep.subr.mxu0 0.0
      %1805 = vmatpush2.msra.mxu0 0.0
      %1806 = vmatprep.subr.mxu0 0.0
      %1807 = vmatpush2.msra.mxu0 0.0
      %1808 = vmatprep.subr.mxu0 0.0
      %1809 = vmatpush2.msra.mxu0 0.0
      %1810 = vmatprep.subr.mxu0 0.0
      %1811 = vmatpush2.msra.mxu0 0.0
      %1812 = vmatprep.subr.mxu0 0.0
      %1813 = vmatpush2.msra.mxu0 0.0
      %1814 = vmatprep.subr.mxu0 0.0
      %1815 = vmatpush2.msra.mxu0 0.0
      %1816 = vmatprep.mubr.f32.mxu0 0.0
      %1817 = vmatmul.mubr.f32.gmra.mxu0 %v1747
      %v1818 = vpop.f32.mrf.mxu0
      %v1819 = vadd.f32 0.0, %v1818
      %v1820 = vpop.f32.mrf.mxu0
      %1821 = vdwg.mxu0
      %v1822 = vadd.f32 %v1738, %v1819
      %1823 = vmatprep.subr.mxu0 0.0
      %1824 = vmatpush1.msra.mxu0 0.0
      %1825 = vmatprep.subr.mxu0 0.0
      %1826 = vmatpush1.msra.mxu0 0.0
      %1827 = vmatprep.subr.mxu0 0.0
      %1828 = vmatpush1.msra.mxu0 0.0
      %1829 = vmatprep.subr.mxu0 0.0
      %1830 = vmatpush1.msra.mxu0 0.0
      %1831 = vmatprep.subr.mxu0 0.0
      %1832 = vmatpush1.msra.mxu0 0.0
      %1833 = vmatprep.subr.mxu0 0.0
      %1834 = vmatpush1.msra.mxu0 0.0
      %1835 = vmatprep.subr.mxu0 0.0
      %1836 = vmatpush1.msra.mxu0 0.0
      %1837 = vmatprep.subr.mxu0 0.0
      %1838 = vmatpush1.msra.mxu0 0.0
      %1839 = vmatprep.subr.mxu0 0.0
      %1840 = vmatpush1.msra.mxu0 0.0
      %1841 = vmatprep.subr.mxu0 0.0
      %1842 = vmatpush1.msra.mxu0 0.0
      %1843 = vmatprep.subr.mxu0 0.0
      %1844 = vmatpush1.msra.mxu0 0.0
      %1845 = vmatprep.subr.mxu0 0.0
      %1846 = vmatpush1.msra.mxu0 0.0
      %1847 = vmatprep.subr.mxu0 0.0
      %1848 = vmatpush1.msra.mxu0 0.0
      %1849 = vmatprep.subr.mxu0 0.0
      %1850 = vmatpush1.msra.mxu0 0.0
      %1851 = vmatprep.subr.mxu0 0.0
      %1852 = vmatpush1.msra.mxu0 0.0
      %1853 = vmatprep.subr.mxu0 0.0
      %1854 = vmatpush1.msra.mxu0 %v1593
      %1855 = vmatprep.subr.mxu0 0.0
      %1856 = vmatpush2.msra.mxu0 0.0
      %1857 = vmatprep.subr.mxu0 0.0
      %1858 = vmatpush2.msra.mxu0 0.0
      %1859 = vmatprep.subr.mxu0 0.0
      %1860 = vmatpush2.msra.mxu0 0.0
      %1861 = vmatprep.subr.mxu0 0.0
      %1862 = vmatpush2.msra.mxu0 0.0
      %1863 = vmatprep.subr.mxu0 0.0
      %1864 = vmatpush2.msra.mxu0 0.0
      %1865 = vmatprep.subr.mxu0 0.0
      %1866 = vmatpush2.msra.mxu0 0.0
      %1867 = vmatprep.subr.mxu0 0.0
      %1868 = vmatpush2.msra.mxu0 0.0
      %1869 = vmatprep.subr.mxu0 0.0
      %1870 = vmatpush2.msra.mxu0 0.0
      %1871 = vmatprep.subr.mxu0 0.0
      %1872 = vmatpush2.msra.mxu0 0.0
      %1873 = vmatprep.subr.mxu0 0.0
      %1874 = vmatpush2.msra.mxu0 0.0
      %1875 = vmatprep.subr.mxu0 0.0
      %1876 = vmatpush2.msra.mxu0 0.0
      %1877 = vmatprep.subr.mxu0 0.0
      %1878 = vmatpush2.msra.mxu0 0.0
      %1879 = vmatprep.subr.mxu0 0.0
      %1880 = vmatpush2.msra.mxu0 0.0
      %1881 = vmatprep.subr.mxu0 0.0
      %1882 = vmatpush2.msra.mxu0 0.0
      %1883 = vmatprep.subr.mxu0 0.0
      %1884 = vmatpush2.msra.mxu0 0.0
      %1885 = vmatprep.subr.mxu0 0.0
      %1886 = vmatpush2.msra.mxu0 0.0
      %1887 = vmatprep.mubr.f32.mxu0 0.0
      %1888 = vmatmul.mubr.f32.gmra.mxu0 %v829
      %v1889 = vpop.f32.mrf.mxu0
      %v1890 = vadd.f32 0.0, %v1889
      %v1891 = vpop.f32.mrf.mxu0
      %1892 = vmatprep.mubr.f32.mxu0 0.0
      %1893 = vmatmul.mubr.f32.gmra.mxu0 %v832
      %v1894 = vpop.f32.mrf.mxu0
      %v1895 = vadd.f32 0.0, %v1894
      %v1896 = vpop.f32.mrf.mxu0
      %1897 = vmatprep.mubr.f32.mxu0 0.0
      %1898 = vmatmul.mubr.f32.gmra.mxu0 %v835
      %v1899 = vpop.f32.mrf.mxu0
      %v1900 = vadd.f32 0.0, %v1899
      %v1901 = vpop.f32.mrf.mxu0
      %1902 = vmatprep.mubr.f32.mxu0 0.0
      %1903 = vmatmul.mubr.f32.gmra.mxu0 %v838
      %v1904 = vpop.f32.mrf.mxu0
      %v1905 = vadd.f32 0.0, %v1904
      %v1906 = vpop.f32.mrf.mxu0
      %1907 = vmatprep.mubr.f32.mxu0 0.0
      %1908 = vmatmul.mubr.f32.gmra.mxu0 %v841
      %v1909 = vpop.f32.mrf.mxu0
      %v1910 = vadd.f32 0.0, %v1909
      %v1911 = vpop.f32.mrf.mxu0
      %1912 = vmatprep.mubr.f32.mxu0 0.0
      %1913 = vmatmul.mubr.f32.gmra.mxu0 %v844
      %v1914 = vpop.f32.mrf.mxu0
      %v1915 = vadd.f32 0.0, %v1914
      %v1916 = vpop.f32.mrf.mxu0
      %1917 = vmatprep.mubr.f32.mxu0 0.0
      %1918 = vmatmul.mubr.f32.gmra.mxu0 %v847
      %v1919 = vpop.f32.mrf.mxu0
      %v1920 = vadd.f32 0.0, %v1919
      %v1921 = vpop.f32.mrf.mxu0
      %1922 = vdwg.mxu0
      %1923 = vmatprep.subr.mxu0 0.0
      %1924 = vmatpush1.msra.mxu0 0.0
      %1925 = vmatprep.subr.mxu0 0.0
      %1926 = vmatpush1.msra.mxu0 0.0
      %1927 = vmatprep.subr.mxu0 0.0
      %1928 = vmatpush1.msra.mxu0 0.0
      %1929 = vmatprep.subr.mxu0 0.0
      %1930 = vmatpush1.msra.mxu0 0.0
      %1931 = vmatprep.subr.mxu0 0.0
      %1932 = vmatpush1.msra.mxu0 0.0
      %1933 = vmatprep.subr.mxu0 0.0
      %1934 = vmatpush1.msra.mxu0 0.0
      %1935 = vmatprep.subr.mxu0 0.0
      %1936 = vmatpush1.msra.mxu0 0.0
      %1937 = vmatprep.subr.mxu0 0.0
      %1938 = vmatpush1.msra.mxu0 0.0
      %1939 = vmatprep.subr.mxu0 0.0
      %1940 = vmatpush1.msra.mxu0 0.0
      %1941 = vmatprep.subr.mxu0 0.0
      %1942 = vmatpush1.msra.mxu0 0.0
      %1943 = vmatprep.subr.mxu0 0.0
      %1944 = vmatpush1.msra.mxu0 0.0
      %1945 = vmatprep.subr.mxu0 0.0
      %1946 = vmatpush1.msra.mxu0 0.0
      %1947 = vmatprep.subr.mxu0 0.0
      %1948 = vmatpush1.msra.mxu0 0.0
      %1949 = vmatprep.subr.mxu0 0.0
      %1950 = vmatpush1.msra.mxu0 0.0
      %1951 = vmatprep.subr.mxu0 0.0
      %1952 = vmatpush1.msra.mxu0 0.0
      %1953 = vmatprep.subr.mxu0 0.0
      %1954 = vmatpush1.msra.mxu0 %v1669
      %1955 = vmatprep.subr.mxu0 0.0
      %1956 = vmatpush2.msra.mxu0 0.0
      %1957 = vmatprep.subr.mxu0 0.0
      %1958 = vmatpush2.msra.mxu0 0.0
      %1959 = vmatprep.subr.mxu0 0.0
      %1960 = vmatpush2.msra.mxu0 0.0
      %1961 = vmatprep.subr.mxu0 0.0
      %1962 = vmatpush2.msra.mxu0 0.0
      %1963 = vmatprep.subr.mxu0 0.0
      %1964 = vmatpush2.msra.mxu0 0.0
      %1965 = vmatprep.subr.mxu0 0.0
      %1966 = vmatpush2.msra.mxu0 0.0
      %1967 = vmatprep.subr.mxu0 0.0
      %1968 = vmatpush2.msra.mxu0 0.0
      %1969 = vmatprep.subr.mxu0 0.0
      %1970 = vmatpush2.msra.mxu0 0.0
      %1971 = vmatprep.subr.mxu0 0.0
      %1972 = vmatpush2.msra.mxu0 0.0
      %1973 = vmatprep.subr.mxu0 0.0
      %1974 = vmatpush2.msra.mxu0 0.0
      %1975 = vmatprep.subr.mxu0 0.0
      %1976 = vmatpush2.msra.mxu0 0.0
      %1977 = vmatprep.subr.mxu0 0.0
      %1978 = vmatpush2.msra.mxu0 0.0
      %1979 = vmatprep.subr.mxu0 0.0
      %1980 = vmatpush2.msra.mxu0 0.0
      %1981 = vmatprep.subr.mxu0 0.0
      %1982 = vmatpush2.msra.mxu0 0.0
      %1983 = vmatprep.subr.mxu0 0.0
      %1984 = vmatpush2.msra.mxu0 0.0
      %1985 = vmatprep.subr.mxu0 0.0
      %1986 = vmatpush2.msra.mxu0 0.0
      %1987 = vmatprep.mubr.f32.mxu0 0.0
      %1988 = vmatmul.mubr.f32.gmra.mxu0 %v686
      %v1989 = vpop.f32.mrf.mxu0
      %v1990 = vadd.f32 %v1890, %v1989
      %v1991 = vpop.f32.mrf.mxu0
      %1992 = vmatprep.mubr.f32.mxu0 0.0
      %1993 = vmatmul.mubr.f32.gmra.mxu0 %v689
      %v1994 = vpop.f32.mrf.mxu0
      %v1995 = vadd.f32 %v1895, %v1994
      %v1996 = vpop.f32.mrf.mxu0
      %1997 = vmatprep.mubr.f32.mxu0 0.0
      %1998 = vmatmul.mubr.f32.gmra.mxu0 %v692
      %v1999 = vpop.f32.mrf.mxu0
      %v2000 = vadd.f32 %v1900, %v1999
      %v2001 = vpop.f32.mrf.mxu0
      %2002 = vmatprep.mubr.f32.mxu0 0.0
      %2003 = vmatmul.mubr.f32.gmra.mxu0 %v695
      %v2004 = vpop.f32.mrf.mxu0
      %v2005 = vadd.f32 %v1905, %v2004
      %v2006 = vpop.f32.mrf.mxu0
      %2007 = vmatprep.mubr.f32.mxu0 0.0
      %2008 = vmatmul.mubr.f32.gmra.mxu0 %v698
      %v2009 = vpop.f32.mrf.mxu0
      %v2010 = vadd.f32 %v1910, %v2009
      %v2011 = vpop.f32.mrf.mxu0
      %2012 = vmatprep.mubr.f32.mxu0 0.0
      %2013 = vmatmul.mubr.f32.gmra.mxu0 %v701
      %v2014 = vpop.f32.mrf.mxu0
      %v2015 = vadd.f32 %v1915, %v2014
      %v2016 = vpop.f32.mrf.mxu0
      %2017 = vmatprep.mubr.f32.mxu0 0.0
      %2018 = vmatmul.mubr.f32.gmra.mxu0 %v704
      %v2019 = vpop.f32.mrf.mxu0
      %v2020 = vadd.f32 %v1920, %v2019
      %v2021 = vpop.f32.mrf.mxu0
      %2022 = vdwg.mxu0
      %2023 = vmatprep.subr.mxu0 0.0
      %2024 = vmatpush1.msra.mxu0 0.0
      %2025 = vmatprep.subr.mxu0 0.0
      %2026 = vmatpush1.msra.mxu0 0.0
      %2027 = vmatprep.subr.mxu0 0.0
      %2028 = vmatpush1.msra.mxu0 0.0
      %2029 = vmatprep.subr.mxu0 0.0
      %2030 = vmatpush1.msra.mxu0 0.0
      %2031 = vmatprep.subr.mxu0 0.0
      %2032 = vmatpush1.msra.mxu0 0.0
      %2033 = vmatprep.subr.mxu0 0.0
      %2034 = vmatpush1.msra.mxu0 0.0
      %2035 = vmatprep.subr.mxu0 0.0
      %2036 = vmatpush1.msra.mxu0 0.0
      %2037 = vmatprep.subr.mxu0 0.0
      %2038 = vmatpush1.msra.mxu0 0.0
      %2039 = vmatprep.subr.mxu0 0.0
      %2040 = vmatpush1.msra.mxu0 0.0
      %2041 = vmatprep.subr.mxu0 0.0
      %2042 = vmatpush1.msra.mxu0 0.0
      %2043 = vmatprep.subr.mxu0 0.0
      %2044 = vmatpush1.msra.mxu0 0.0
      %2045 = vmatprep.subr.mxu0 0.0
      %2046 = vmatpush1.msra.mxu0 0.0
      %2047 = vmatprep.subr.mxu0 0.0
      %2048 = vmatpush1.msra.mxu0 0.0
      %2049 = vmatprep.subr.mxu0 0.0
      %2050 = vmatpush1.msra.mxu0 0.0
      %2051 = vmatprep.subr.mxu0 0.0
      %2052 = vmatpush1.msra.mxu0 0.0
      %2053 = vmatprep.subr.mxu0 0.0
      %2054 = vmatpush1.msra.mxu0 %v1750
      %2055 = vmatprep.subr.mxu0 0.0
      %2056 = vmatpush2.msra.mxu0 0.0
      %2057 = vmatprep.subr.mxu0 0.0
      %2058 = vmatpush2.msra.mxu0 0.0
      %2059 = vmatprep.subr.mxu0 0.0
      %2060 = vmatpush2.msra.mxu0 0.0
      %2061 = vmatprep.subr.mxu0 0.0
      %2062 = vmatpush2.msra.mxu0 0.0
      %2063 = vmatprep.subr.mxu0 0.0
      %2064 = vmatpush2.msra.mxu0 0.0
      %2065 = vmatprep.subr.mxu0 0.0
      %2066 = vmatpush2.msra.mxu0 0.0
      %2067 = vmatprep.subr.mxu0 0.0
      %2068 = vmatpush2.msra.mxu0 0.0
      %2069 = vmatprep.subr.mxu0 0.0
      %2070 = vmatpush2.msra.mxu0 0.0
      %2071 = vmatprep.subr.mxu0 0.0
      %2072 = vmatpush2.msra.mxu0 0.0
      %2073 = vmatprep.subr.mxu0 0.0
      %2074 = vmatpush2.msra.mxu0 0.0
      %2075 = vmatprep.subr.mxu0 0.0
      %2076 = vmatpush2.msra.mxu0 0.0
      %2077 = vmatprep.subr.mxu0 0.0
      %2078 = vmatpush2.msra.mxu0 0.0
      %2079 = vmatprep.subr.mxu0 0.0
      %2080 = vmatpush2.msra.mxu0 0.0
      %2081 = vmatprep.subr.mxu0 0.0
      %2082 = vmatpush2.msra.mxu0 0.0
      %2083 = vmatprep.subr.mxu0 0.0
      %2084 = vmatpush2.msra.mxu0 0.0
      %2085 = vmatprep.subr.mxu0 0.0
      %2086 = vmatpush2.msra.mxu0 0.0
      %2087 = vmatprep.mubr.f32.mxu0 0.0
      %2088 = vmatmul.mubr.f32.gmra.mxu0 %v1002
      %v2089 = vpop.f32.mrf.mxu0
      %v2090 = vadd.f32 0.0, %v2089
      %v2091 = vpop.f32.mrf.mxu0
      %2092 = vmatprep.mubr.f32.mxu0 0.0
      %2093 = vmatmul.mubr.f32.gmra.mxu0 %v1004
      %v2094 = vpop.f32.mrf.mxu0
      %v2095 = vadd.f32 0.0, %v2094
      %v2096 = vpop.f32.mrf.mxu0
      %2097 = vmatprep.mubr.f32.mxu0 0.0
      %2098 = vmatmul.mubr.f32.gmra.mxu0 %v1006
      %v2099 = vpop.f32.mrf.mxu0
      %v2100 = vadd.f32 0.0, %v2099
      %v2101 = vpop.f32.mrf.mxu0
      %2102 = vmatprep.mubr.f32.mxu0 0.0
      %2103 = vmatmul.mubr.f32.gmra.mxu0 %v1008
      %v2104 = vpop.f32.mrf.mxu0
      %v2105 = vadd.f32 0.0, %v2104
      %v2106 = vpop.f32.mrf.mxu0
      %2107 = vmatprep.mubr.f32.mxu0 0.0
      %2108 = vmatmul.mubr.f32.gmra.mxu0 %v1010
      %v2109 = vpop.f32.mrf.mxu0
      %v2110 = vadd.f32 0.0, %v2109
      %v2111 = vpop.f32.mrf.mxu0
      %2112 = vmatprep.mubr.f32.mxu0 0.0
      %2113 = vmatmul.mubr.f32.gmra.mxu0 %v1012
      %v2114 = vpop.f32.mrf.mxu0
      %v2115 = vadd.f32 0.0, %v2114
      %v2116 = vpop.f32.mrf.mxu0
      %2117 = vmatprep.mubr.f32.mxu0 0.0
      %2118 = vmatmul.mubr.f32.gmra.mxu0 %v1014
      %v2119 = vpop.f32.mrf.mxu0
      %v2120 = vadd.f32 0.0, %v2119
      %v2121 = vpop.f32.mrf.mxu0
      %2122 = vdwg.mxu0
      %v2123 = vadd.f32 %v1990, %v2090
      %v2124 = vadd.f32 %v1995, %v2095
      %v2125 = vadd.f32 %v2000, %v2100
      %v2126 = vadd.f32 %v2005, %v2105
      %v2127 = vadd.f32 %v2010, %v2110
      %v2128 = vadd.f32 %v2015, %v2115
      %v2129 = vadd.f32 %v2020, %v2120
      %v2130 = vadd.f32 %v1574, %v2123
      %v2131 = vadd.f32 %v1575, %v2124
      %v2132 = vadd.f32 %v1576, %v2125
      %v2133 = vadd.f32 %v1577, %v2126
      %v2134 = vadd.f32 %v1578, %v2127
      %v2135 = vadd.f32 %v1579, %v2128
      %v2136 = vadd.f32 %v1580, %v2129
      %2137 = vst.msk [vmem:[%s623] sm:$0xff] %vm681, %v2130
      %2138 = vst.msk [vmem:[%s623 + $0x8] sm:$0xff] %vm681, %v2131
      %2139 = vst.msk [vmem:[%s623 + $0x10] sm:$0xff] %vm681, %v2132
      %2140 = vst.msk [vmem:[%s623 + $0x18] sm:$0xff] %vm681, %v2133
      %2141 = vst.msk [vmem:[%s623 + $0x20] sm:$0xff] %vm681, %v2134
      %2142 = vst.msk [vmem:[%s623 + $0x28] sm:$0xff] %vm681, %v2135
      %2143 = vst.msk [vmem:[%s623 + $0x30] sm:$0xff] %vm681, %v2136
      %v2144 = vadd.f32 %v1581, %v1822
      %s2145 = scalar_lea.vmem %s623, 56
      %2146 = vst.msk [vmem:[%s2145] sm:$0xff] %vm681, %v2144
      %s2147 = smul.u32 8, %s24
      %p2148 = scmp.lt.s32.totalorder %s23, 1
      %s2149 = scalar_select %p2148, %s23, 1
      %p2150 = scmp.lt.s32.totalorder %s2147, 7
      %s2151 = scalar_select %p2150, %s2147, 7
      %s2152 = smul.addr %s2149, 8
      %s2153 = sadd.s32 %s2151, %s2152
      %s2154 = smul.addr %s2153, 8
      %s2155 = scalar_lea.vmem %s8, %s2154
      // Predicated region
      $region53: #{downsample_conv.1} parent=51 // pred_check
        %p2156 = pneg %p277
      $region54: #{downsample_conv.1} parent=51 // pred_check_branch
        %2158 = sbr.rel (%p2156) target = $region56
      $region55: #{downsample_conv.1} parent=51 // pred_region
        %s2159 = smul.u32 8, %s24
      $region56: #{downsample_conv.1} parent=51 // pred_fallthru
        _
    $region52: #{downsample_conv.1} parent=5 // pred_fallthru
      _
    %p2160 = scmp.le.s32.totalorder 2, %s14
    // Predicated region
    $region57: #{downsample_conv.1} parent=5 // pred_check
      %p2161 = pneg %p2160
    $region58: #{downsample_conv.1} parent=5 // pred_check_branch
      %2163 = sbr.rel (%p2161) target = $region60
    $region59: #{downsample_conv.1} parent=5 // pred_region
      %s2164 = ssub.s32 %s14, 2
      // Predicated region
      $region61: #{downsample_conv.1} parent=59 // pred_check
        %p2165 = pneg %p283
      $region62: #{downsample_conv.1} parent=59 // pred_check_branch
        %2167 = sbr.rel (%p2165) target = $region64
      $region63: #{downsample_conv.1} parent=59 // pred_region
        %s2168 = smul.u32 8, %s26
        %p2169 = scmp.lt.s32.totalorder %s25, 1
        %s2170 = scalar_select %p2169, %s25, 1
        %p2171 = scmp.lt.s32.totalorder %s2168, 7
        %s2172 = scalar_select %p2171, %s2168, 7
        %s2173 = smul.addr %s2170, 8
        %s2174 = sadd.s32 %s2172, %s2173
        %s2175 = smul.addr %s2174, 8
        %s2176 = scalar_lea.vmem %s8, %s2175
      $region64: #{downsample_conv.1} parent=59 // pred_fallthru
        _
    $region60: #{downsample_conv.1} parent=5 // pred_fallthru
      _
  $region6: #{downsample_conv.1} parent=0 // loop_footer
    %s18 = sadd.s32 1, %s14
  $region7: #{downsample_conv.1} parent=0 // loop_footer_branch
    %13 = sbr.rel target = $region3
  $region8: #{downsample_conv.1} parent=0 // loop_exit
    _

</llo_original>
